<compile_context>
chip_gen: v5e
topology: v5e:2x2
jax: 0.10.0
libtpu: 0.0.40
codegen_flags: <defaults>
</compile_context>

<pallas_src>
import functools
import math

import jax
import jax.numpy as jnp
from jax.experimental import pallas as pl
from jax.experimental.pallas import tpu as pltpu

LANE = 128


def _round_up(v, m):
    return ((v + m - 1) // m) * m


def _pad2(a, rows, cols):
    return jnp.pad(a, ((0, rows - a.shape[0]), (0, cols - a.shape[1])))


# ------------------------------ fused kernel ------------------------------- #
def fused_net_kernel(
    a_ref, x_ref, w1_ref, b1_ref, w2_ref, b2_ref,     # inputs
    o_ref,                                            # output
    xw1i_ref, xw1r_ref, acc1_ref, h_ref,              # scratch: layer 1
    xw2i_ref, xw2r_ref, acc2_ref,                     # scratch: layer 2
    *, h_pad, c_pad, tk,
):
    layer = pl.program_id(0)          # 0 -> conv1, 1 -> conv2
    k = pl.program_id(1)              # source-node block (reduction axis)
    nk = pl.num_programs(1)
    row0 = pl.multiple_of(k * tk, LANE)

    # ---------------- layer 1: h = relu(A @ (X Wi1) + X Wr1 + b1) ----------
    @pl.when(jnp.logical_and(layer == 0, k == 0))
    def _():
        # one fat X @ [Wi1 | Wr1] matmul; both halves cached in VMEM scratch
        xw = jnp.dot(x_ref[...], w1_ref[...], preferred_element_type=jnp.float32)
        xw1i_ref[...] = xw[:, :h_pad].astype(xw1i_ref.dtype)
        xw1r_ref[...] = xw[:, h_pad:].astype(xw1r_ref.dtype)
        acc1_ref[...] = jnp.zeros_like(acc1_ref)

    @pl.when(layer == 0)
    def _():
        acc1_ref[...] += jnp.dot(
            a_ref[...], xw1i_ref[pl.ds(row0, tk), :],
            preferred_element_type=jnp.float32)

    @pl.when(jnp.logical_and(layer == 0, k == nk - 1))
    def _():
        h = acc1_ref[...] + xw1r_ref[...].astype(jnp.float32) + b1_ref[...]
        # ARMAConv's internal act=ReLU; the wrapper's extra ReLU is idempotent.
        h_ref[...] = jnp.maximum(h, 0.0).astype(h_ref.dtype)

    # ---------------- layer 2: out = relu(A @ (h Wi2) + h Wr2 + b2) --------
    @pl.when(jnp.logical_and(layer == 1, k == 0))
    def _():
        xw = jnp.dot(h_ref[...], w2_ref[...], preferred_element_type=jnp.float32)
        xw2i_ref[...] = xw[:, :c_pad].astype(xw2i_ref.dtype)
        xw2r_ref[...] = xw[:, c_pad:].astype(xw2r_ref.dtype)
        acc2_ref[...] = jnp.zeros_like(acc2_ref)

    @pl.when(layer == 1)
    def _():
        acc2_ref[...] += jnp.dot(
            a_ref[...], xw2i_ref[pl.ds(row0, tk), :],
            preferred_element_type=jnp.float32)

    @pl.when(jnp.logical_and(layer == 1, k == nk - 1))
    def _():
        out = acc2_ref[...] + xw2r_ref[...].astype(jnp.float32) + b2_ref[...]
        o_ref[...] = jnp.maximum(out, 0.0).astype(o_ref.dtype)


# --------------------------------- glue ------------------------------------ #
def gcn_norm_dense(edge_index, num_nodes):
    """Dense D^{-1/2} A D^{-1/2} (no self-loops), A_hat[dst, src]."""
    row, col = edge_index[0], edge_index[1]           # row = src, col = dst
    a = jnp.zeros((num_nodes, num_nodes), jnp.float32).at[col, row].add(1.0)
    deg = jnp.zeros((num_nodes,), jnp.float32).at[col].add(1.0)
    dinv = jnp.where(deg > 0, 1.0 / jnp.sqrt(deg), 0.0)
    return dinv[:, None] * a * dinv[None, :]


def net_forward(x, edge_index, params):
    """Eval-mode forward of Net as one fused Pallas kernel."""
    n, f = x.shape
    h_dim = params["w1_init"].shape[1]
    c_dim = params["w2_init"].shape[1]

    n_pad = _round_up(n, LANE)
    f_pad = _round_up(f, LANE)
    h_pad = _round_up(h_dim, LANE)
    c_pad = _round_up(c_dim, LANE)

    # Column tile of A_hat (reduction axis). Multiple of 128, divides n_pad,
    # capped at 512 so the double-buffered bf16 slab fits v7x's 64 MiB VMEM.
    tk = math.gcd(n_pad, 512)
    nk = n_pad // tk

    a_hat = gcn_norm_dense(edge_index, n)
    a_p = _pad2(a_hat, n_pad, n_pad).astype(jnp.bfloat16)
    x_p = _pad2(x, n_pad, f_pad).astype(jnp.bfloat16)

    w1 = jnp.concatenate(
        [_pad2(params["w1_init"], f_pad, h_pad),
         _pad2(params["w1_root"], f_pad, h_pad)], axis=1).astype(jnp.bfloat16)
    b1 = _pad2(params["b1"], 1, h_pad).astype(jnp.float32)
    w2 = jnp.concatenate(
        [_pad2(params["w2_init"], h_pad, c_pad),
         _pad2(params["w2_root"], h_pad, c_pad)], axis=1).astype(jnp.bfloat16)
    b2 = _pad2(params["b2"], 1, c_pad).astype(jnp.float32)

    kernel = functools.partial(fused_net_kernel, h_pad=h_pad, c_pad=c_pad, tk=tk)

    out_p = pl.pallas_call(
        kernel,
        out_shape=jax.ShapeDtypeStruct((n_pad, c_pad), jnp.float32),
        grid_spec=pltpu.PrefetchScalarGridSpec(
            num_scalar_prefetch=0,
            grid=(2, nk),                               # (layer, src-block)
            in_specs=[
                pl.BlockSpec((n_pad, tk), lambda l, k: (0, k)),       # A_hat
                pl.BlockSpec((n_pad, f_pad), lambda l, k: (0, 0)),    # X
                pl.BlockSpec((f_pad, 2 * h_pad), lambda l, k: (0, 0)),  # [Wi1|Wr1]
                pl.BlockSpec((1, h_pad), lambda l, k: (0, 0)),        # b1
                pl.BlockSpec((h_pad, 2 * c_pad), lambda l, k: (0, 0)),  # [Wi2|Wr2]
                pl.BlockSpec((1, c_pad), lambda l, k: (0, 0)),        # b2
            ],
            out_specs=pl.BlockSpec((n_pad, c_pad), lambda l, k: (0, 0)),
            scratch_shapes=[
                pltpu.VMEM((n_pad, h_pad), jnp.bfloat16),   # X @ Wi1
                pltpu.VMEM((n_pad, h_pad), jnp.bfloat16),   # X @ Wr1
                pltpu.VMEM((n_pad, h_pad), jnp.float32),    # acc1
                pltpu.VMEM((n_pad, h_pad), jnp.bfloat16),   # h
                pltpu.VMEM((n_pad, c_pad), jnp.bfloat16),   # h @ Wi2
                pltpu.VMEM((n_pad, c_pad), jnp.bfloat16),   # h @ Wr2
                pltpu.VMEM((n_pad, c_pad), jnp.float32),    # acc2
            ],
        ),
        compiler_params=pltpu.CompilerParams(
            dimension_semantics=("arbitrary", "arbitrary"),
        ),
    )(a_p, x_p, w1, b1, w2, b2)

    return out_p[:n, :c_dim]


def net_forward_ref(x, edge_index, params):
    """Pure-JAX f32 reference for validation."""
    a = gcn_norm_dense(edge_index, x.shape[0])
    h = jnp.maximum(
        a @ (x @ params["w1_init"]) + x @ params["w1_root"] + params["b1"], 0.0)
    return jnp.maximum(
        a @ (h @ params["w2_init"]) + h @ params["w2_root"] + params["b2"], 0.0)


def init_params(key, num_node_features, hidden_dim, num_classes):
    k1, k2, k3, k4 = jax.random.split(key, 4)

    def glorot(k, fan_in, fan_out):
        lim = jnp.sqrt(6.0 / (fan_in + fan_out))
        return jax.random.uniform(k, (fan_in, fan_out), jnp.float32, -lim, lim)

    return {
        "w1_init": glorot(k1, num_node_features, hidden_dim),
        "w1_root": glorot(k2, num_node_features, hidden_dim),
        "b1": jnp.zeros((1, hidden_dim), jnp.float32),
        "w2_init": glorot(k3, hidden_dim, num_classes),
        "w2_root": glorot(k4, hidden_dim, num_classes),
        "b2": jnp.zeros((1, num_classes), jnp.float32),
    }


# --------------------------------- main ------------------------------------ #
if __name__ == "__main__":
    key = jax.random.PRNGKey(0)
    kx, kp = jax.random.split(key)

    num_nodes = 16
    num_node_features = 8
    hidden_dim = 16
    num_classes = 4

    # Node features.
    x = jax.random.normal(kx, (num_nodes, num_node_features), jnp.float32)

    # Undirected ring graph: edges (i, i+1) in both directions.
    src = jnp.arange(num_nodes, dtype=jnp.int32)
    dst = (src + 1) % num_nodes
    edge_index = jnp.stack(
        [jnp.concatenate([src, dst]), jnp.concatenate([dst, src])], axis=0
    )  # (2, 2*num_nodes)

    params = init_params(kp, num_node_features, hidden_dim, num_classes)

    out = net_forward(x, edge_index, params)
    jax.block_until_ready(out)
    assert out.shape == (num_nodes, num_classes)

    ref = net_forward_ref(x, edge_index, params)
    assert jnp.allclose(out, ref, rtol=7e-2, atol=7e-2), "mismatch vs reference"

    print("KERNEL_OK")
</pallas_src>

<mosaic_0001>
module attributes {stable_mosaic.version = 11 : i64} {
  func.func @fused_net_kernel(%arg0: i32, %arg1: i32, %arg2: memref<128x128xbf16, #tpu.memory_space<vmem>>, %arg3: memref<128x128xbf16, #tpu.memory_space<vmem>>, %arg4: memref<128x256xbf16, #tpu.memory_space<vmem>>, %arg5: memref<1x128xf32, #tpu.memory_space<vmem>>, %arg6: memref<128x256xbf16, #tpu.memory_space<vmem>>, %arg7: memref<1x128xf32, #tpu.memory_space<vmem>>, %arg8: memref<128x128xf32, #tpu.memory_space<vmem>>, %arg9: memref<128x128xbf16, #tpu.memory_space<vmem>>, %arg10: memref<128x128xbf16, #tpu.memory_space<vmem>>, %arg11: memref<128x128xf32, #tpu.memory_space<vmem>>, %arg12: memref<128x128xbf16, #tpu.memory_space<vmem>>, %arg13: memref<128x128xbf16, #tpu.memory_space<vmem>>, %arg14: memref<128x128xbf16, #tpu.memory_space<vmem>>, %arg15: memref<128x128xf32, #tpu.memory_space<vmem>>) attributes {dimension_semantics = [#tpu.dimension_semantics<arbitrary>, #tpu.dimension_semantics<arbitrary>], iteration_bounds = array<i64: 2, 1>, scalar_prefetch = 0 : i64, scratch_operands = 7 : i64, tpu.core_type = #tpu.core_type<tc>, window_params = [{transform_indices = @transform_0, window_bounds = array<i64: 128, 128>}, {pipeline_mode = #tpu.pipeline_mode<synchronous>, transform_indices = @transform_1, window_bounds = array<i64: 128, 128>}, {pipeline_mode = #tpu.pipeline_mode<synchronous>, transform_indices = @transform_2, window_bounds = array<i64: 128, 256>}, {pipeline_mode = #tpu.pipeline_mode<synchronous>, transform_indices = @transform_3, window_bounds = array<i64: 1, 128>}, {pipeline_mode = #tpu.pipeline_mode<synchronous>, transform_indices = @transform_4, window_bounds = array<i64: 128, 256>}, {pipeline_mode = #tpu.pipeline_mode<synchronous>, transform_indices = @transform_5, window_bounds = array<i64: 1, 128>}, {pipeline_mode = #tpu.pipeline_mode<synchronous>, transform_indices = @transform_6, window_bounds = array<i64: 128, 128>}]} {
    %c128_i32 = arith.constant 128 : i32
    %0 = arith.muli %arg1, %c128_i32 : i32
    %1 = tpu.assume_multiple %0, 128 : i32
    %c0_i32 = arith.constant 0 : i32
    %2 = arith.cmpi eq, %arg0, %c0_i32 : i32
    %c0_i32_0 = arith.constant 0 : i32
    %3 = arith.cmpi eq, %arg1, %c0_i32_0 : i32
    %4 = arith.andi %2, %3 : i1
    %5 = arith.extui %4 : i1 to i32
    %c0_i32_1 = arith.constant 0 : i32
    %6 = arith.cmpi ne, %5, %c0_i32_1 : i32
    scf.if %6 {
      %c0 = arith.constant 0 : index
      %c0_14 = arith.constant 0 : index
      %28 = vector.load %arg3[%c0, %c0_14] : memref<128x128xbf16, #tpu.memory_space<vmem>>, vector<128x128xbf16>
      %c0_15 = arith.constant 0 : index
      %c0_16 = arith.constant 0 : index
      %29 = vector.load %arg4[%c0_15, %c0_16] : memref<128x256xbf16, #tpu.memory_space<vmem>>, vector<128x256xbf16>
      %cst = arith.constant dense<0.000000e+00> : vector<128x256xf32>
      %30 = tpu.matmul %28, %29, %cst {dimension_numbers = #tpu.dot_dimension_numbers<[1], [0], [0], [1], [0, 0, 1, 1], [], []>} : vector<128x128xbf16>, vector<128x256xbf16>, vector<128x256xf32> -> vector<128x256xf32>
      %31 = vector.extract_strided_slice %30 {offsets = [0, 0], sizes = [128, 128], strides = [1, 1]} : vector<128x256xf32> to vector<128x128xf32>
      %32 = arith.truncf %31 : vector<128x128xf32> to vector<128x128xbf16>
      %c0_17 = arith.constant 0 : index
      %c0_18 = arith.constant 0 : index
      %33 = vector.load %arg9[%c0_17, %c0_18] : memref<128x128xbf16, #tpu.memory_space<vmem>>, vector<128x128xbf16>
      tpu.vector_store %arg9[%c0_17, %c0_18], %32 {strides = array<i32>} : memref<128x128xbf16, #tpu.memory_space<vmem>>, vector<128x128xbf16>,
      %34 = vector.extract_strided_slice %30 {offsets = [0, 128], sizes = [128, 128], strides = [1, 1]} : vector<128x256xf32> to vector<128x128xf32>
      %35 = arith.truncf %34 : vector<128x128xf32> to vector<128x128xbf16>
      %c0_19 = arith.constant 0 : index
      %c0_20 = arith.constant 0 : index
      %36 = vector.load %arg10[%c0_19, %c0_20] : memref<128x128xbf16, #tpu.memory_space<vmem>>, vector<128x128xbf16>
      tpu.vector_store %arg10[%c0_19, %c0_20], %35 {strides = array<i32>} : memref<128x128xbf16, #tpu.memory_space<vmem>>, vector<128x128xbf16>,
      %cst_21 = arith.constant 0.000000e+00 : f32
      %37 = vector.broadcast %cst_21 : f32 to vector<128x128xf32>
      %c0_22 = arith.constant 0 : index
      %c0_23 = arith.constant 0 : index
      %38 = vector.load %arg11[%c0_22, %c0_23] : memref<128x128xf32, #tpu.memory_space<vmem>>, vector<128x128xf32>
      tpu.vector_store %arg11[%c0_22, %c0_23], %37 {strides = array<i32>} : memref<128x128xf32, #tpu.memory_space<vmem>>, vector<128x128xf32>,
    } else {
    }
    %c0_i32_2 = arith.constant 0 : i32
    %7 = arith.cmpi eq, %arg0, %c0_i32_2 : i32
    %8 = arith.extui %7 : i1 to i32
    %c0_i32_3 = arith.constant 0 : i32
    %9 = arith.cmpi ne, %8, %c0_i32_3 : i32
    scf.if %9 {
      %c0 = arith.constant 0 : index
      %c0_14 = arith.constant 0 : index
      %28 = vector.load %arg11[%c0, %c0_14] : memref<128x128xf32, #tpu.memory_space<vmem>>, vector<128x128xf32>
      %c0_15 = arith.constant 0 : index
      %c0_16 = arith.constant 0 : index
      %29 = vector.load %arg2[%c0_15, %c0_16] : memref<128x128xbf16, #tpu.memory_space<vmem>>, vector<128x128xbf16>
      %30 = arith.index_cast %1 : i32 to index
      %c0_17 = arith.constant 0 : index
      %31 = vector.load %arg9[%30, %c0_17] : memref<128x128xbf16, #tpu.memory_space<vmem>>, vector<128x128xbf16>
      %cst = arith.constant dense<0.000000e+00> : vector<128x128xf32>
      %32 = tpu.matmul %29, %31, %cst {dimension_numbers = #tpu.dot_dimension_numbers<[1], [0], [0], [1], [0, 0, 1, 1], [], []>} : vector<128x128xbf16>, vector<128x128xbf16>, vector<128x128xf32> -> vector<128x128xf32>
      %33 = arith.addf %28, %32 : vector<128x128xf32>
      %c0_18 = arith.constant 0 : index
      %c0_19 = arith.constant 0 : index
      %34 = vector.load %arg11[%c0_18, %c0_19] : memref<128x128xf32, #tpu.memory_space<vmem>>, vector<128x128xf32>
      tpu.vector_store %arg11[%c0_18, %c0_19], %33 {strides = array<i32>} : memref<128x128xf32, #tpu.memory_space<vmem>>, vector<128x128xf32>,
    } else {
    }
    %c0_i32_4 = arith.constant 0 : i32
    %10 = arith.cmpi eq, %arg0, %c0_i32_4 : i32
    %c0_i32_5 = arith.constant 0 : i32
    %11 = arith.cmpi eq, %arg1, %c0_i32_5 : i32
    %12 = arith.andi %10, %11 : i1
    %13 = arith.extui %12 : i1 to i32
    %c0_i32_6 = arith.constant 0 : i32
    %14 = arith.cmpi ne, %13, %c0_i32_6 : i32
    scf.if %14 {
      %c0 = arith.constant 0 : index
      %c0_14 = arith.constant 0 : index
      %28 = vector.load %arg11[%c0, %c0_14] : memref<128x128xf32, #tpu.memory_space<vmem>>, vector<128x128xf32>
      %c0_15 = arith.constant 0 : index
      %c0_16 = arith.constant 0 : index
      %29 = vector.load %arg10[%c0_15, %c0_16] : memref<128x128xbf16, #tpu.memory_space<vmem>>, vector<128x128xbf16>
      %30 = arith.extf %29 : vector<128x128xbf16> to vector<128x128xf32>
      %31 = arith.addf %28, %30 : vector<128x128xf32>
      %c0_17 = arith.constant 0 : index
      %c0_18 = arith.constant 0 : index
      %32 = vector.load %arg5[%c0_17, %c0_18] : memref<1x128xf32, #tpu.memory_space<vmem>>, vector<1x128xf32>
      %33 = vector.broadcast %32 : vector<1x128xf32> to vector<128x128xf32>
      %34 = arith.addf %31, %33 : vector<128x128xf32>
      %cst = arith.constant 0.000000e+00 : f32
      %35 = vector.broadcast %cst : f32 to vector<128x128xf32>
      %36 = arith.maximumf %34, %35 : vector<128x128xf32>
      %37 = arith.truncf %36 : vector<128x128xf32> to vector<128x128xbf16>
      %c0_19 = arith.constant 0 : index
      %c0_20 = arith.constant 0 : index
      %38 = vector.load %arg12[%c0_19, %c0_20] : memref<128x128xbf16, #tpu.memory_space<vmem>>, vector<128x128xbf16>
      tpu.vector_store %arg12[%c0_19, %c0_20], %37 {strides = array<i32>} : memref<128x128xbf16, #tpu.memory_space<vmem>>, vector<128x128xbf16>,
    } else {
    }
    %c1_i32 = arith.constant 1 : i32
    %15 = arith.cmpi eq, %arg0, %c1_i32 : i32
    %c0_i32_7 = arith.constant 0 : i32
    %16 = arith.cmpi eq, %arg1, %c0_i32_7 : i32
    %17 = arith.andi %15, %16 : i1
    %18 = arith.extui %17 : i1 to i32
    %c0_i32_8 = arith.constant 0 : i32
    %19 = arith.cmpi ne, %18, %c0_i32_8 : i32
    scf.if %19 {
      %c0 = arith.constant 0 : index
      %c0_14 = arith.constant 0 : index
      %28 = vector.load %arg12[%c0, %c0_14] : memref<128x128xbf16, #tpu.memory_space<vmem>>, vector<128x128xbf16>
      %c0_15 = arith.constant 0 : index
      %c0_16 = arith.constant 0 : index
      %29 = vector.load %arg6[%c0_15, %c0_16] : memref<128x256xbf16, #tpu.memory_space<vmem>>, vector<128x256xbf16>
      %cst = arith.constant dense<0.000000e+00> : vector<128x256xf32>
      %30 = tpu.matmul %28, %29, %cst {dimension_numbers = #tpu.dot_dimension_numbers<[1], [0], [0], [1], [0, 0, 1, 1], [], []>} : vector<128x128xbf16>, vector<128x256xbf16>, vector<128x256xf32> -> vector<128x256xf32>
      %31 = vector.extract_strided_slice %30 {offsets = [0, 0], sizes = [128, 128], strides = [1, 1]} : vector<128x256xf32> to vector<128x128xf32>
      %32 = arith.truncf %31 : vector<128x128xf32> to vector<128x128xbf16>
      %c0_17 = arith.constant 0 : index
      %c0_18 = arith.constant 0 : index
      %33 = vector.load %arg13[%c0_17, %c0_18] : memref<128x128xbf16, #tpu.memory_space<vmem>>, vector<128x128xbf16>
      tpu.vector_store %arg13[%c0_17, %c0_18], %32 {strides = array<i32>} : memref<128x128xbf16, #tpu.memory_space<vmem>>, vector<128x128xbf16>,
      %34 = vector.extract_strided_slice %30 {offsets = [0, 128], sizes = [128, 128], strides = [1, 1]} : vector<128x256xf32> to vector<128x128xf32>
      %35 = arith.truncf %34 : vector<128x128xf32> to vector<128x128xbf16>
      %c0_19 = arith.constant 0 : index
      %c0_20 = arith.constant 0 : index
      %36 = vector.load %arg14[%c0_19, %c0_20] : memref<128x128xbf16, #tpu.memory_space<vmem>>, vector<128x128xbf16>
      tpu.vector_store %arg14[%c0_19, %c0_20], %35 {strides = array<i32>} : memref<128x128xbf16, #tpu.memory_space<vmem>>, vector<128x128xbf16>,
      %cst_21 = arith.constant 0.000000e+00 : f32
      %37 = vector.broadcast %cst_21 : f32 to vector<128x128xf32>
      %c0_22 = arith.constant 0 : index
      %c0_23 = arith.constant 0 : index
      %38 = vector.load %arg15[%c0_22, %c0_23] : memref<128x128xf32, #tpu.memory_space<vmem>>, vector<128x128xf32>
      tpu.vector_store %arg15[%c0_22, %c0_23], %37 {strides = array<i32>} : memref<128x128xf32, #tpu.memory_space<vmem>>, vector<128x128xf32>,
    } else {
    }
    %c1_i32_9 = arith.constant 1 : i32
    %20 = arith.cmpi eq, %arg0, %c1_i32_9 : i32
    %21 = arith.extui %20 : i1 to i32
    %c0_i32_10 = arith.constant 0 : i32
    %22 = arith.cmpi ne, %21, %c0_i32_10 : i32
    scf.if %22 {
      %c0 = arith.constant 0 : index
      %c0_14 = arith.constant 0 : index
      %28 = vector.load %arg15[%c0, %c0_14] : memref<128x128xf32, #tpu.memory_space<vmem>>, vector<128x128xf32>
      %c0_15 = arith.constant 0 : index
      %c0_16 = arith.constant 0 : index
      %29 = vector.load %arg2[%c0_15, %c0_16] : memref<128x128xbf16, #tpu.memory_space<vmem>>, vector<128x128xbf16>
      %30 = arith.index_cast %1 : i32 to index
      %c0_17 = arith.constant 0 : index
      %31 = vector.load %arg13[%30, %c0_17] : memref<128x128xbf16, #tpu.memory_space<vmem>>, vector<128x128xbf16>
      %cst = arith.constant dense<0.000000e+00> : vector<128x128xf32>
      %32 = tpu.matmul %29, %31, %cst {dimension_numbers = #tpu.dot_dimension_numbers<[1], [0], [0], [1], [0, 0, 1, 1], [], []>} : vector<128x128xbf16>, vector<128x128xbf16>, vector<128x128xf32> -> vector<128x128xf32>
      %33 = arith.addf %28, %32 : vector<128x128xf32>
      %c0_18 = arith.constant 0 : index
      %c0_19 = arith.constant 0 : index
      %34 = vector.load %arg15[%c0_18, %c0_19] : memref<128x128xf32, #tpu.memory_space<vmem>>, vector<128x128xf32>
      tpu.vector_store %arg15[%c0_18, %c0_19], %33 {strides = array<i32>} : memref<128x128xf32, #tpu.memory_space<vmem>>, vector<128x128xf32>,
    } else {
    }
    %c1_i32_11 = arith.constant 1 : i32
    %23 = arith.cmpi eq, %arg0, %c1_i32_11 : i32
    %c0_i32_12 = arith.constant 0 : i32
    %24 = arith.cmpi eq, %arg1, %c0_i32_12 : i32
    %25 = arith.andi %23, %24 : i1
    %26 = arith.extui %25 : i1 to i32
    %c0_i32_13 = arith.constant 0 : i32
    %27 = arith.cmpi ne, %26, %c0_i32_13 : i32
    scf.if %27 {
      %c0 = arith.constant 0 : index
      %c0_14 = arith.constant 0 : index
      %28 = vector.load %arg15[%c0, %c0_14] : memref<128x128xf32, #tpu.memory_space<vmem>>, vector<128x128xf32>
      %c0_15 = arith.constant 0 : index
      %c0_16 = arith.constant 0 : index
      %29 = vector.load %arg14[%c0_15, %c0_16] : memref<128x128xbf16, #tpu.memory_space<vmem>>, vector<128x128xbf16>
      %30 = arith.extf %29 : vector<128x128xbf16> to vector<128x128xf32>
      %31 = arith.addf %28, %30 : vector<128x128xf32>
      %c0_17 = arith.constant 0 : index
      %c0_18 = arith.constant 0 : index
      %32 = vector.load %arg7[%c0_17, %c0_18] : memref<1x128xf32, #tpu.memory_space<vmem>>, vector<1x128xf32>
      %33 = vector.broadcast %32 : vector<1x128xf32> to vector<128x128xf32>
      %34 = arith.addf %31, %33 : vector<128x128xf32>
      %cst = arith.constant 0.000000e+00 : f32
      %35 = vector.broadcast %cst : f32 to vector<128x128xf32>
      %36 = arith.maximumf %34, %35 : vector<128x128xf32>
      %c0_19 = arith.constant 0 : index
      %c0_20 = arith.constant 0 : index
      %37 = vector.load %arg8[%c0_19, %c0_20] : memref<128x128xf32, #tpu.memory_space<vmem>>, vector<128x128xf32>
      tpu.vector_store %arg8[%c0_19, %c0_20], %36 {strides = array<i32>} : memref<128x128xf32, #tpu.memory_space<vmem>>, vector<128x128xf32>,
    } else {
    }
    return
  }
  func.func @transform_0(%arg0: i32, %arg1: i32) -> (i32, i32) {
    %c0_i32 = arith.constant 0 : i32
    %c0_i32_0 = arith.constant 0 : i32
    return %c0_i32, %arg1 : i32, i32
  }
  func.func @transform_1(%arg0: i32, %arg1: i32) -> (i32, i32) {
    %c0_i32 = arith.constant 0 : i32
    %c0_i32_0 = arith.constant 0 : i32
    %c0_i32_1 = arith.constant 0 : i32
    return %c0_i32, %c0_i32_0 : i32, i32
  }
  func.func @transform_2(%arg0: i32, %arg1: i32) -> (i32, i32) {
    %c0_i32 = arith.constant 0 : i32
    %c0_i32_0 = arith.constant 0 : i32
    %c0_i32_1 = arith.constant 0 : i32
    return %c0_i32, %c0_i32_0 : i32, i32
  }
  func.func @transform_3(%arg0: i32, %arg1: i32) -> (i32, i32) {
    %c0_i32 = arith.constant 0 : i32
    %c0_i32_0 = arith.constant 0 : i32
    %c0_i32_1 = arith.constant 0 : i32
    return %c0_i32, %c0_i32_0 : i32, i32
  }
  func.func @transform_4(%arg0: i32, %arg1: i32) -> (i32, i32) {
    %c0_i32 = arith.constant 0 : i32
    %c0_i32_0 = arith.constant 0 : i32
    %c0_i32_1 = arith.constant 0 : i32
    return %c0_i32, %c0_i32_0 : i32, i32
  }
  func.func @transform_5(%arg0: i32, %arg1: i32) -> (i32, i32) {
    %c0_i32 = arith.constant 0 : i32
    %c0_i32_0 = arith.constant 0 : i32
    %c0_i32_1 = arith.constant 0 : i32
    return %c0_i32, %c0_i32_0 : i32, i32
  }
  func.func @transform_6(%arg0: i32, %arg1: i32) -> (i32, i32) {
    %c0_i32 = arith.constant 0 : i32
    %c0_i32_0 = arith.constant 0 : i32
    %c0_i32_1 = arith.constant 0 : i32
    return %c0_i32, %c0_i32_0 : i32, i32
  }
}

</mosaic_0001>

<llo_original>
// kernel: tpu_custom_call.1
$region0: #{tpu_custom_call.1}
  #allocation0 [shape = 'u32[]', space=smem, size = 0x4, offset = 0x4, fixed_abs, tag = 'smem constant byte address 0x4 - core index']
  #allocation1 [shape = 'u32[72,128]{1,0:T(1,128)}', space=vmem, size = 0x9000, scoped, tag = 'internal scratch']
  #allocation2 [shape = 'bf16[128,128]{1,0:T(8,128)(2,1)}', space=vmem, size = 0x8000, scoped, tag = 'scratch operand']
  #allocation3 [shape = 'bf16[128,128]{1,0:T(8,128)(2,1)}', space=vmem, size = 0x8000, scoped, tag = 'scratch operand']
  #allocation4 [shape = 'f32[128,128]{1,0:T(8,128)}', space=vmem, size = 0x10000, scoped, tag = 'scratch operand']
  #allocation5 [shape = 'bf16[128,128]{1,0:T(8,128)(2,1)}', space=vmem, size = 0x8000, scoped, tag = 'scratch operand']
  #allocation6 [shape = 'bf16[128,128]{1,0:T(8,128)(2,1)}', space=vmem, size = 0x8000, scoped, tag = 'scratch operand']
  #allocation7 [shape = 'bf16[128,128]{1,0:T(8,128)(2,1)}', space=vmem, size = 0x8000, scoped, tag = 'scratch operand']
  #allocation8 [shape = 'f32[128,128]{1,0:T(8,128)}', space=vmem, size = 0x10000, scoped, tag = 'scratch operand']
  %s0 = inlined_call_operand.hbm [shape: bf16[128,128], index: 0, kind: input, shape index: {}]
  %s1 = inlined_call_operand.hbm [shape: bf16[128,128], index: 1, kind: input, shape index: {}]
  %s2 = inlined_call_operand.hbm [shape: bf16[128,256], index: 2, kind: input, shape index: {}]
  %s3 = inlined_call_operand.vmem [shape: f32[1,128], index: 3, kind: input, shape index: {}]
  %s4 = inlined_call_operand.hbm [shape: bf16[128,256], index: 4, kind: input, shape index: {}]
  %s5 = inlined_call_operand.vmem [shape: f32[1,128], index: 5, kind: input, shape index: {}]
  %s6 = inlined_call_operand.hbm [shape: f32[128,128], index: 6, kind: output, shape index: {}]
  %s7 = sld [smem:[#allocation0]]
  $region97: #{tpu_custom_call.1} parent=0
    _
  %s9 = ssub.s32 1, %s7
  %s10 = scalar_select 0, %s9, %s7
  $region1: #{tpu_custom_call.1} parent=0
    #allocation9 [shape = 'u8[32768]{0}', space=vmem, size = 0x8000, scoped, tag = 'input window, operand 0, single buffered']
    #allocation10 [shape = 's32[2]{0}', space=sflag, size = 0x8, scoped, tag = 'scoped memory for tpu_custom_call.1']
    #allocation11 [shape = 's32[2]{0}', space=sflag, size = 0x8, scoped, tag = 'scoped memory for tpu_custom_call.1']
    #allocation12 [shape = 'u8[32768]{0}', space=vmem, size = 0x8000, scoped, tag = 'input window, operand 1, single buffered']
    #allocation13 [shape = 's32[1]{0}', space=sflag, size = 0x4, scoped, tag = 'scoped memory for tpu_custom_call.1']
    #allocation14 [shape = 'u8[65536]{0}', space=vmem, size = 0x10000, scoped, tag = 'input window, operand 2, single buffered']
    #allocation15 [shape = 'u8[65536]{0}', space=vmem, size = 0x10000, scoped, tag = 'input window, operand 4, single buffered']
    #allocation16 [shape = 's32[1]{0}', space=sflag, size = 0x4, scoped, tag = 'scoped memory for tpu_custom_call.1']
    #allocation17 [shape = 'u8[65536]{0}', space=vmem, size = 0x10000, scoped, tag = 'output window, operand 0, single buffered']
    %11 = vsyncpa [#allocation10], 0
    %12 = vsyncpa [#allocation13], 0
    %13 = vsyncpa [#allocation16], 0
    %14 = vsyncpa [#allocation11], 0
    loop: start=0, step=1, limit=4
    $region2: #{tpu_custom_call.1} parent=1 // loop_pre_header
      _
    $region3: #{tpu_custom_call.1} parent=1 // loop_header
      %s16 = sphi 0, %s20
      %p17 = scmp.ge.s32.totalorder %s16, 4
      %s23 = sphi 0, %s35
      %s24 = sphi 0, %s31
      %s25 = sphi 0, %s23
      %s26 = sphi 0, %s24
      %s27 = sphi 0, %s25
      %s28 = sphi 0, %s26
      %s38 = sphi 0, %s40
      %s41 = sphi 0, %s38
      %s42 = sphi 0, %s41
      %s58 = sphi 0, %s42
      %s62 = sphi 0, %s62
      %s64 = sphi 0, %s62
      %s65 = sphi 0, %s64
      %s79 = sphi 0, %s65
      %s83 = sphi 0, %s83
      %s85 = sphi 0, %s83
      %s86 = sphi 0, %s85
      %s100 = sphi 0, %s86
      %s104 = sphi 0, %s104
      %s106 = sphi 0, %s104
      %s107 = sphi 0, %s106
      %s121 = sphi 0, %s107
      %s125 = sphi 0, %s125
      %s127 = sphi 0, %s125
      %s128 = sphi 0, %s127
      %s142 = sphi 0, %s128
      %s146 = sphi 0, %s146
      %s148 = sphi 0, %s146
      %s149 = sphi 0, %s148
      %s163 = sphi 0, %s149
      %s167 = sphi 0, %s167
      %s169 = sphi 0, %s167
      %s170 = sphi 0, %s169
      %s184 = sphi 0, %s170
    $region4: #{tpu_custom_call.1} parent=1 // loop_header_branch
      %19 = sbr.rel (%p17) target = $region8
    $region5: #{tpu_custom_call.1} parent=1 // loop_body
      %s21 = ssub.s32 %s16, 1
      %s22 = ssub.s32 %s16, 2
      %s29 = sadd.s32 1, %s24
      %p30 = scmp.ge.s32.totalorder %s29, 1
      %s31 = scalar_select %p30, 0, %s29
      %s32 = sadd.s32 1, %s23
      %s33 = scalar_select %p30, %s32, %s23
      %p34 = scmp.ge.s32.totalorder %s33, 2
      %s35 = scalar_select %p34, 0, %s33
      %s36 = ssub.s32 %s24, %s31
      %p37 = scmp.eq.s32.totalorder %s36, 0
      %s39 = sadd.s32 %s38, 1
      %s40 = scalar_select %p37, %s38, %s39
      %p43 = pneg %p37
      %p44 = scmp.eq.s32.totalorder %s16, 1
      %p45 = por %p43, %p44
      %p46 = scmp.ne.s32.totalorder %s38, %s41
      %p47 = scmp.eq.s32.totalorder %s16, 0
      %p48 = por %p46, %p47
      %p49 = scmp.ne.s32.totalorder %s38, %s41
      %p50 = scmp.eq.s32.totalorder %s21, 1
      %p51 = por %p49, %p50
      %p52 = scmp.ne.s32.totalorder %s41, %s42
      %p53 = scmp.eq.s32.totalorder %s21, 0
      %p54 = por %p52, %p53
      %p55 = scmp.ne.s32.totalorder %s41, %s42
      %p56 = scmp.eq.s32.totalorder %s22, 1
      %p57 = por %p55, %p56
      %p59 = scmp.ne.s32.totalorder %s42, %s58
      %p60 = scmp.eq.s32.totalorder %s22, 0
      %p61 = por %p59, %p60
      %s63 = sadd.s32 %s62, 1
      %p66 = scmp.eq.s32.totalorder %s16, 1
      %p67 = scmp.ne.s32.totalorder %s62, %s64
      %p68 = scmp.eq.s32.totalorder %s16, 0
      %p69 = por %p67, %p68
      %p70 = scmp.ne.s32.totalorder %s62, %s64
      %p71 = scmp.eq.s32.totalorder %s21, 1
      %p72 = por %p70, %p71
      %p73 = scmp.ne.s32.totalorder %s64, %s65
      %p74 = scmp.eq.s32.totalorder %s21, 0
      %p75 = por %p73, %p74
      %p76 = scmp.ne.s32.totalorder %s64, %s65
      %p77 = scmp.eq.s32.totalorder %s22, 1
      %p78 = por %p76, %p77
      %p80 = scmp.ne.s32.totalorder %s65, %s79
      %p81 = scmp.eq.s32.totalorder %s22, 0
      %p82 = por %p80, %p81
      %s84 = sadd.s32 %s83, 1
      %p87 = scmp.eq.s32.totalorder %s16, 1
      %p88 = scmp.ne.s32.totalorder %s83, %s85
      %p89 = scmp.eq.s32.totalorder %s16, 0
      %p90 = por %p88, %p89
      %p91 = scmp.ne.s32.totalorder %s83, %s85
      %p92 = scmp.eq.s32.totalorder %s21, 1
      %p93 = por %p91, %p92
      %p94 = scmp.ne.s32.totalorder %s85, %s86
      %p95 = scmp.eq.s32.totalorder %s21, 0
      %p96 = por %p94, %p95
      %p97 = scmp.ne.s32.totalorder %s85, %s86
      %p98 = scmp.eq.s32.totalorder %s22, 1
      %p99 = por %p97, %p98
      %p101 = scmp.ne.s32.totalorder %s86, %s100
      %p102 = scmp.eq.s32.totalorder %s22, 0
      %p103 = por %p101, %p102
      %s105 = sadd.s32 %s104, 1
      %p108 = scmp.eq.s32.totalorder %s16, 1
      %p109 = scmp.ne.s32.totalorder %s104, %s106
      %p110 = scmp.eq.s32.totalorder %s16, 0
      %p111 = por %p109, %p110
      %p112 = scmp.ne.s32.totalorder %s104, %s106
      %p113 = scmp.eq.s32.totalorder %s21, 1
      %p114 = por %p112, %p113
      %p115 = scmp.ne.s32.totalorder %s106, %s107
      %p116 = scmp.eq.s32.totalorder %s21, 0
      %p117 = por %p115, %p116
      %p118 = scmp.ne.s32.totalorder %s106, %s107
      %p119 = scmp.eq.s32.totalorder %s22, 1
      %p120 = por %p118, %p119
      %p122 = scmp.ne.s32.totalorder %s107, %s121
      %p123 = scmp.eq.s32.totalorder %s22, 0
      %p124 = por %p122, %p123
      %s126 = sadd.s32 %s125, 1
      %p129 = scmp.eq.s32.totalorder %s16, 1
      %p130 = scmp.ne.s32.totalorder %s125, %s127
      %p131 = scmp.eq.s32.totalorder %s16, 0
      %p132 = por %p130, %p131
      %p133 = scmp.ne.s32.totalorder %s125, %s127
      %p134 = scmp.eq.s32.totalorder %s21, 1
      %p135 = por %p133, %p134
      %p136 = scmp.ne.s32.totalorder %s127, %s128
      %p137 = scmp.eq.s32.totalorder %s21, 0
      %p138 = por %p136, %p137
      %p139 = scmp.ne.s32.totalorder %s127, %s128
      %p140 = scmp.eq.s32.totalorder %s22, 1
      %p141 = por %p139, %p140
      %p143 = scmp.ne.s32.totalorder %s128, %s142
      %p144 = scmp.eq.s32.totalorder %s22, 0
      %p145 = por %p143, %p144
      %s147 = sadd.s32 %s146, 1
      %p150 = scmp.eq.s32.totalorder %s16, 1
      %p151 = scmp.ne.s32.totalorder %s146, %s148
      %p152 = scmp.eq.s32.totalorder %s16, 0
      %p153 = por %p151, %p152
      %p154 = scmp.ne.s32.totalorder %s146, %s148
      %p155 = scmp.eq.s32.totalorder %s21, 1
      %p156 = por %p154, %p155
      %p157 = scmp.ne.s32.totalorder %s148, %s149
      %p158 = scmp.eq.s32.totalorder %s21, 0
      %p159 = por %p157, %p158
      %p160 = scmp.ne.s32.totalorder %s148, %s149
      %p161 = scmp.eq.s32.totalorder %s22, 1
      %p162 = por %p160, %p161
      %p164 = scmp.ne.s32.totalorder %s149, %s163
      %p165 = scmp.eq.s32.totalorder %s22, 0
      %p166 = por %p164, %p165
      %s168 = sadd.s32 %s167, 1
      %p171 = scmp.eq.s32.totalorder %s16, 1
      %p172 = scmp.ne.s32.totalorder %s167, %s169
      %p173 = scmp.eq.s32.totalorder %s16, 0
      %p174 = por %p172, %p173
      %p175 = scmp.ne.s32.totalorder %s167, %s169
      %p176 = scmp.eq.s32.totalorder %s21, 1
      %p177 = por %p175, %p176
      %p178 = scmp.ne.s32.totalorder %s169, %s170
      %p179 = scmp.eq.s32.totalorder %s21, 0
      %p180 = por %p178, %p179
      %p181 = scmp.ne.s32.totalorder %s169, %s170
      %p182 = scmp.eq.s32.totalorder %s22, 1
      %p183 = por %p181, %p182
      %p185 = scmp.ne.s32.totalorder %s170, %s184
      %p186 = scmp.eq.s32.totalorder %s22, 0
      %p187 = por %p185, %p186
      %p188 = scmp.le.s32.totalorder 1, %s16
      %p189 = scmp.lt.s32.totalorder %s16, 3
      %p190 = pnand %p188, %p189
      %p191 = pneg %p190
      // Predicated region
      $region9: #{tpu_custom_call.1} parent=5 // pred_check
        _
      $region10: #{tpu_custom_call.1} parent=5 // pred_check_branch
        %193 = sbr.rel (%p190) target = $region12
      $region11: #{tpu_custom_call.1} parent=5 // pred_region
        %s194 = ssub.s32 %s16, 1
        // Predicated region
        $region13: #{tpu_custom_call.1} parent=11 // pred_check
          %p195 = pneg %p54
        $region14: #{tpu_custom_call.1} parent=11 // pred_check_branch
          %197 = sbr.rel (%p195) target = $region16
        $region15: #{tpu_custom_call.1} parent=11 // pred_region
          %199 = vsyncadd [#allocation10], 0
          %s200 = smul.addr %s26, 4
          %s201 = scalar_lea.hbm %s0, %s200
          %s202 = sshll.u32 %s201, 4
          %s203 = int_to_ptr.hbm [resolvable:$true] %s202
          %s204 = sshll.u32 [#allocation9], 4
          %s205 = int_to_ptr.vmem [resolvable:$true] %s204
          %210 = dma.hbm_to_vmem [thread:$0]  %s203, 1024, %s205, [#allocation10], 64, 64, 4
        $region16: #{tpu_custom_call.1} parent=11 // pred_fallthru
          _
        // Predicated region
        $region17: #{tpu_custom_call.1} parent=11 // pred_check
          %p211 = pneg %p75
        $region18: #{tpu_custom_call.1} parent=11 // pred_check_branch
          %213 = sbr.rel (%p211) target = $region20
        $region19: #{tpu_custom_call.1} parent=11 // pred_region
          %215 = vsyncadd [#allocation13], 0
          %s216 = sshll.u32 %s1, 4
          %s217 = int_to_ptr.hbm [resolvable:$true] %s216
          %s218 = sshll.u32 [#allocation12], 4
          %s219 = int_to_ptr.vmem [resolvable:$true] %s218
          %224 = dma.hbm_to_vmem [thread:$0]  %s217, 1024, %s219, [#allocation13], 64, 64, 4
        $region20: #{tpu_custom_call.1} parent=11 // pred_fallthru
          _
        // Predicated region
        $region21: #{tpu_custom_call.1} parent=11 // pred_check
          %p225 = pneg %p96
        $region22: #{tpu_custom_call.1} parent=11 // pred_check_branch
          %227 = sbr.rel (%p225) target = $region24
        $region23: #{tpu_custom_call.1} parent=11 // pred_region
          %229 = vsyncadd [#allocation13], 0
          %s230 = sshll.u32 %s2, 4
          %s231 = int_to_ptr.hbm [resolvable:$true] %s230
          %s232 = sshll.u32 [#allocation14], 4
          %s233 = int_to_ptr.vmem [resolvable:$true] %s232
          %238 = dma.hbm_to_vmem [thread:$0]  %s231, 2048, %s233, [#allocation13], 128, 128, 8
        $region24: #{tpu_custom_call.1} parent=11 // pred_fallthru
          _
        // Predicated region
        $region25: #{tpu_custom_call.1} parent=11 // pred_check
          %p239 = pneg %p117
        $region26: #{tpu_custom_call.1} parent=11 // pred_check_branch
          %241 = sbr.rel (%p239) target = $region28
        $region27: #{tpu_custom_call.1} parent=11 // pred_region
          _
        $region28: #{tpu_custom_call.1} parent=11 // pred_fallthru
          _
        // Predicated region
        $region29: #{tpu_custom_call.1} parent=11 // pred_check
          %p242 = pneg %p138
        $region30: #{tpu_custom_call.1} parent=11 // pred_check_branch
          %244 = sbr.rel (%p242) target = $region32
        $region31: #{tpu_custom_call.1} parent=11 // pred_region
          %246 = vsyncadd [#allocation16], 0
          %s247 = sshll.u32 %s4, 4
          %s248 = int_to_ptr.hbm [resolvable:$true] %s247
          %s249 = sshll.u32 [#allocation15], 4
          %s250 = int_to_ptr.vmem [resolvable:$true] %s249
          %255 = dma.hbm_to_vmem [thread:$0]  %s248, 2048, %s250, [#allocation16], 128, 128, 8
        $region32: #{tpu_custom_call.1} parent=11 // pred_fallthru
          _
        // Predicated region
        $region33: #{tpu_custom_call.1} parent=11 // pred_check
          %p256 = pneg %p159
        $region34: #{tpu_custom_call.1} parent=11 // pred_check_branch
          %258 = sbr.rel (%p256) target = $region36
        $region35: #{tpu_custom_call.1} parent=11 // pred_region
          _
        $region36: #{tpu_custom_call.1} parent=11 // pred_fallthru
          _
      $region12: #{tpu_custom_call.1} parent=5 // pred_fallthru
        _
      %p259 = scmp.lt.s32.totalorder %s16, 2
      // Predicated region
      $region37: #{tpu_custom_call.1} parent=5 // pred_check
        %p260 = pneg %p259
      $region38: #{tpu_custom_call.1} parent=5 // pred_check_branch
        %262 = sbr.rel (%p260) target = $region40
      $region39: #{tpu_custom_call.1} parent=5 // pred_region
        _
      $region40: #{tpu_custom_call.1} parent=5 // pred_fallthru
        _
      %p263 = scmp.le.s32.totalorder 1, %s16
      %p264 = scmp.lt.s32.totalorder %s16, 3
      %p265 = pnand %p263, %p264
      %p266 = pneg %p265
      // Predicated region
      $region41: #{tpu_custom_call.1} parent=5 // pred_check
        _
      $region42: #{tpu_custom_call.1} parent=5 // pred_check_branch
        %268 = sbr.rel (%p265) target = $region44
      $region43: #{tpu_custom_call.1} parent=5 // pred_region
        %s269 = ssub.s32 %s16, 1
        // Predicated region
        $region45: #{tpu_custom_call.1} parent=43 // pred_check
          %p270 = pneg %p54
        $region46: #{tpu_custom_call.1} parent=43 // pred_check_branch
          %272 = sbr.rel (%p270) target = $region48
        $region47: #{tpu_custom_call.1} parent=43 // pred_region
          %274 = dma.done [#allocation10], 1024
        $region48: #{tpu_custom_call.1} parent=43 // pred_fallthru
          _
        // Predicated region
        $region49: #{tpu_custom_call.1} parent=43 // pred_check
          %p275 = pneg %p75
        $region50: #{tpu_custom_call.1} parent=43 // pred_check_branch
          %277 = sbr.rel (%p275) target = $region52
        $region51: #{tpu_custom_call.1} parent=43 // pred_region
          %279 = dma.done [#allocation13], 1024
        $region52: #{tpu_custom_call.1} parent=43 // pred_fallthru
          _
        // Predicated region
        $region53: #{tpu_custom_call.1} parent=43 // pred_check
          %p280 = pneg %p96
        $region54: #{tpu_custom_call.1} parent=43 // pred_check_branch
          %282 = sbr.rel (%p280) target = $region56
        $region55: #{tpu_custom_call.1} parent=43 // pred_region
          %284 = dma.done [#allocation13], 2048
        $region56: #{tpu_custom_call.1} parent=43 // pred_fallthru
          _
        // Predicated region
        $region57: #{tpu_custom_call.1} parent=43 // pred_check
          %p285 = pneg %p138
        $region58: #{tpu_custom_call.1} parent=43 // pred_check_branch
          %287 = sbr.rel (%p285) target = $region60
        $region59: #{tpu_custom_call.1} parent=43 // pred_region
          %289 = dma.done [#allocation16], 2048
        $region60: #{tpu_custom_call.1} parent=43 // pred_fallthru
          _
        %p290 = pneg %p54
        %p291 = pneg %p51
        %p292 = pneg %p75
        %p293 = pneg %p72
        %p294 = pneg %p96
        %p295 = pneg %p93
        %p296 = pneg %p117
        %p297 = pneg %p114
        %p298 = pneg %p138
        %p299 = pneg %p135
        %p300 = pneg %p159
        %p301 = pneg %p156
        %p302 = pneg %p180
        %p303 = pneg %p177
        %s304 = smul.u32 %s26, 128
        %p305 = scmp.eq.s32.totalorder %s25, 0
        %p306 = scmp.eq.s32.totalorder %s26, 0
        %p307 = pnand %p305, %p306
        %p308 = pneg %p307
        // Predicated region
        $region61: #{tpu_custom_call.1} parent=43 // pred_check
          _
        $region62: #{tpu_custom_call.1} parent=43 // pred_check_branch
          %310 = sbr.rel (%p307) target = $region64
        $region63: #{tpu_custom_call.1} parent=43 // pred_region
          %v311 = vld [vmem:[#allocation12] sm:$0xf]
          %v312 = vld [vmem:[#allocation12 + $0x4] sm:$0xf]
          %v313 = vld [vmem:[#allocation12 + $0x8] sm:$0xf]
          %v314 = vld [vmem:[#allocation12 + $0xc] sm:$0xf]
          %v315 = vld [vmem:[#allocation12 + $0x10] sm:$0xf]
          %v316 = vld [vmem:[#allocation12 + $0x14] sm:$0xf]
          %v317 = vld [vmem:[#allocation12 + $0x18] sm:$0xf]
          %v318 = vld [vmem:[#allocation12 + $0x1c] sm:$0xf]
          %v319 = vld [vmem:[#allocation12 + $0x20] sm:$0xf]
          %v320 = vld [vmem:[#allocation12 + $0x24] sm:$0xf]
          %v321 = vld [vmem:[#allocation12 + $0x28] sm:$0xf]
          %v322 = vld [vmem:[#allocation12 + $0x2c] sm:$0xf]
          %v323 = vld [vmem:[#allocation12 + $0x30] sm:$0xf]
          %v324 = vld [vmem:[#allocation12 + $0x34] sm:$0xf]
          %v325 = vld [vmem:[#allocation12 + $0x38] sm:$0xf]
          %v326 = vld [vmem:[#allocation12 + $0x3c] sm:$0xf]
          %v327 = vld [vmem:[#allocation14] sm:$0xff]
          %v328 = vld [vmem:[#allocation14 + $0x8] sm:$0xff]
          %v329 = vld [vmem:[#allocation14 + $0x10] sm:$0xff]
          %v330 = vld [vmem:[#allocation14 + $0x18] sm:$0xff]
          %v331 = vld [vmem:[#allocation14 + $0x20] sm:$0xff]
          %v332 = vld [vmem:[#allocation14 + $0x28] sm:$0xff]
          %v333 = vld [vmem:[#allocation14 + $0x30] sm:$0xff]
          %v334 = vld [vmem:[#allocation14 + $0x38] sm:$0xff]
          %v335 = vld [vmem:[#allocation14 + $0x40] sm:$0xff]
          %v336 = vld [vmem:[#allocation14 + $0x48] sm:$0xff]
          %v337 = vld [vmem:[#allocation14 + $0x50] sm:$0xff]
          %v338 = vld [vmem:[#allocation14 + $0x58] sm:$0xff]
          %v339 = vld [vmem:[#allocation14 + $0x60] sm:$0xff]
          %v340 = vld [vmem:[#allocation14 + $0x68] sm:$0xff]
          %v341 = vld [vmem:[#allocation14 + $0x70] sm:$0xff]
          %v342 = vld [vmem:[#allocation14 + $0x78] sm:$0xff]
          %v359 = vunpack.c.l.b16 %v311
          %v360 = vunpack.c.l.b16 %v312
          %v361 = vunpack.c.l.b16 %v313
          %v362 = vunpack.c.l.b16 %v314
          %v363 = vunpack.c.l.b16 %v315
          %v364 = vunpack.c.l.b16 %v316
          %v365 = vunpack.c.l.b16 %v317
          %v366 = vunpack.c.l.b16 %v318
          %v367 = vunpack.c.l.b16 %v319
          %v368 = vunpack.c.l.b16 %v320
          %v369 = vunpack.c.l.b16 %v321
          %v370 = vunpack.c.l.b16 %v322
          %v371 = vunpack.c.l.b16 %v323
          %v372 = vunpack.c.l.b16 %v324
          %v373 = vunpack.c.l.b16 %v325
          %v374 = vunpack.c.l.b16 %v326
          %v375 = vpack.c.b16 %v360, %v359
          %v376 = vpack.c.b16 %v362, %v361
          %v377 = vpack.c.b16 %v364, %v363
          %v378 = vpack.c.b16 %v366, %v365
          %v379 = vpack.c.b16 %v368, %v367
          %v380 = vpack.c.b16 %v370, %v369
          %v381 = vpack.c.b16 %v372, %v371
          %v382 = vpack.c.b16 %v374, %v373
          %v407 = vunpack.c.l.b16 %v327
          %v408 = vunpack.c.h.b16 %v327
          %v409 = vunpack.c.l.b16 %v328
          %v410 = vunpack.c.h.b16 %v328
          %v411 = vunpack.c.l.b16 %v329
          %v412 = vunpack.c.h.b16 %v329
          %v413 = vunpack.c.l.b16 %v330
          %v414 = vunpack.c.h.b16 %v330
          %v415 = vunpack.c.l.b16 %v331
          %v416 = vunpack.c.h.b16 %v331
          %v417 = vunpack.c.l.b16 %v332
          %v418 = vunpack.c.h.b16 %v332
          %v419 = vunpack.c.l.b16 %v333
          %v420 = vunpack.c.h.b16 %v333
          %v421 = vunpack.c.l.b16 %v334
          %v422 = vunpack.c.h.b16 %v334
          %v423 = vunpack.c.l.b16 %v335
          %v424 = vunpack.c.h.b16 %v335
          %v425 = vunpack.c.l.b16 %v336
          %v426 = vunpack.c.h.b16 %v336
          %v427 = vunpack.c.l.b16 %v337
          %v428 = vunpack.c.h.b16 %v337
          %v429 = vunpack.c.l.b16 %v338
          %v430 = vunpack.c.h.b16 %v338
          %v431 = vunpack.c.l.b16 %v339
          %v432 = vunpack.c.h.b16 %v339
          %v433 = vunpack.c.l.b16 %v340
          %v434 = vunpack.c.h.b16 %v340
          %v435 = vunpack.c.l.b16 %v341
          %v436 = vunpack.c.h.b16 %v341
          %v437 = vunpack.c.l.b16 %v342
          %v438 = vunpack.c.h.b16 %v342
          %v439 = vpack.c.b16 %v409, %v407
          %v440 = vpack.c.b16 %v410, %v408
          %v441 = vpack.c.b16 %v413, %v411
          %v442 = vpack.c.b16 %v414, %v412
          %v443 = vpack.c.b16 %v417, %v415
          %v444 = vpack.c.b16 %v418, %v416
          %v445 = vpack.c.b16 %v421, %v419
          %v446 = vpack.c.b16 %v422, %v420
          %v447 = vpack.c.b16 %v425, %v423
          %v448 = vpack.c.b16 %v426, %v424
          %v449 = vpack.c.b16 %v429, %v427
          %v450 = vpack.c.b16 %v430, %v428
          %v451 = vpack.c.b16 %v433, %v431
          %v452 = vpack.c.b16 %v434, %v432
          %v453 = vpack.c.b16 %v437, %v435
          %v454 = vpack.c.b16 %v438, %v436
          %471 = vmatpush.bf16.msra.mxu0 %v453
          %472 = vmatpush.bf16.msra.mxu0 %v451
          %473 = vmatpush.bf16.msra.mxu0 %v449
          %474 = vmatpush.bf16.msra.mxu0 %v447
          %475 = vmatpush.bf16.msra.mxu0 %v445
          %476 = vmatpush.bf16.msra.mxu0 %v443
          %477 = vmatpush.bf16.msra.mxu0 %v441
          %478 = vmatpush.bf16.msra.mxu0 %v439
          %479 = vmatmul.bf16.gmra.mxu0 %v375
          %v480 = vpop.f32.mrf.mxu0
          %v481 = vadd.f32 0.0, %v480
          %v482 = vpop.f32.mrf.mxu0
          %v483 = vadd.f32 0.0, %v482
          %484 = vmatmul.bf16.gmra.mxu0 %v376
          %v485 = vpop.f32.mrf.mxu0
          %v486 = vadd.f32 0.0, %v485
          %v487 = vpop.f32.mrf.mxu0
          %v488 = vadd.f32 0.0, %v487
          %489 = vmatmul.bf16.gmra.mxu0 %v377
          %v490 = vpop.f32.mrf.mxu0
          %v491 = vadd.f32 0.0, %v490
          %v492 = vpop.f32.mrf.mxu0
          %v493 = vadd.f32 0.0, %v492
          %494 = vmatmul.bf16.gmra.mxu0 %v378
          %v495 = vpop.f32.mrf.mxu0
          %v496 = vadd.f32 0.0, %v495
          %v497 = vpop.f32.mrf.mxu0
          %v498 = vadd.f32 0.0, %v497
          %499 = vmatmul.bf16.gmra.mxu0 %v379
          %v500 = vpop.f32.mrf.mxu0
          %v501 = vadd.f32 0.0, %v500
          %v502 = vpop.f32.mrf.mxu0
          %v503 = vadd.f32 0.0, %v502
          %504 = vmatmul.bf16.gmra.mxu0 %v380
          %v505 = vpop.f32.mrf.mxu0
          %v506 = vadd.f32 0.0, %v505
          %v507 = vpop.f32.mrf.mxu0
          %v508 = vadd.f32 0.0, %v507
          %509 = vmatmul.bf16.gmra.mxu0 %v381
          %v510 = vpop.f32.mrf.mxu0
          %v511 = vadd.f32 0.0, %v510
          %v512 = vpop.f32.mrf.mxu0
          %v513 = vadd.f32 0.0, %v512
          %514 = vmatmul.bf16.gmra.mxu0 %v382
          %v515 = vpop.f32.mrf.mxu0
          %v516 = vadd.f32 0.0, %v515
          %v517 = vpop.f32.mrf.mxu0
          %v518 = vadd.f32 0.0, %v517
          %519 = vdwg.mxu0
          %520 = vmatpush.bf16.msra.mxu0 %v454
          %521 = vmatpush.bf16.msra.mxu0 %v452
          %522 = vmatpush.bf16.msra.mxu0 %v450
          %523 = vmatpush.bf16.msra.mxu0 %v448
          %524 = vmatpush.bf16.msra.mxu0 %v446
          %525 = vmatpush.bf16.msra.mxu0 %v444
          %526 = vmatpush.bf16.msra.mxu0 %v442
          %527 = vmatpush.bf16.msra.mxu0 %v440
          %528 = vmatmul.bf16.gmra.mxu0 %v375
          %v529 = vpop.f32.mrf.mxu0
          %v530 = vadd.f32 0.0, %v529
          %v531 = vpop.f32.mrf.mxu0
          %v532 = vadd.f32 0.0, %v531
          %533 = vmatmul.bf16.gmra.mxu0 %v376
          %v534 = vpop.f32.mrf.mxu0
          %v535 = vadd.f32 0.0, %v534
          %v536 = vpop.f32.mrf.mxu0
          %v537 = vadd.f32 0.0, %v536
          %538 = vmatmul.bf16.gmra.mxu0 %v377
          %v539 = vpop.f32.mrf.mxu0
          %v540 = vadd.f32 0.0, %v539
          %v541 = vpop.f32.mrf.mxu0
          %v542 = vadd.f32 0.0, %v541
          %543 = vmatmul.bf16.gmra.mxu0 %v378
          %v544 = vpop.f32.mrf.mxu0
          %v545 = vadd.f32 0.0, %v544
          %v546 = vpop.f32.mrf.mxu0
          %v547 = vadd.f32 0.0, %v546
          %548 = vmatmul.bf16.gmra.mxu0 %v379
          %v549 = vpop.f32.mrf.mxu0
          %v550 = vadd.f32 0.0, %v549
          %v551 = vpop.f32.mrf.mxu0
          %v552 = vadd.f32 0.0, %v551
          %553 = vmatmul.bf16.gmra.mxu0 %v380
          %v554 = vpop.f32.mrf.mxu0
          %v555 = vadd.f32 0.0, %v554
          %v556 = vpop.f32.mrf.mxu0
          %v557 = vadd.f32 0.0, %v556
          %558 = vmatmul.bf16.gmra.mxu0 %v381
          %v559 = vpop.f32.mrf.mxu0
          %v560 = vadd.f32 0.0, %v559
          %v561 = vpop.f32.mrf.mxu0
          %v562 = vadd.f32 0.0, %v561
          %563 = vmatmul.bf16.gmra.mxu0 %v382
          %v564 = vpop.f32.mrf.mxu0
          %v565 = vadd.f32 0.0, %v564
          %v566 = vpop.f32.mrf.mxu0
          %v567 = vadd.f32 0.0, %v566
          %568 = vdwg.mxu0
          %v569 = vpack.c.bf16 %v481, %v481
          %v570 = vpack.c.bf16 %v483, %v483
          %v571 = vpack.c.bf16 %v486, %v486
          %v572 = vpack.c.bf16 %v488, %v488
          %v573 = vpack.c.bf16 %v491, %v491
          %v574 = vpack.c.bf16 %v493, %v493
          %v575 = vpack.c.bf16 %v496, %v496
          %v576 = vpack.c.bf16 %v498, %v498
          %v577 = vpack.c.bf16 %v501, %v501
          %v578 = vpack.c.bf16 %v503, %v503
          %v579 = vpack.c.bf16 %v506, %v506
          %v580 = vpack.c.bf16 %v508, %v508
          %v581 = vpack.c.bf16 %v511, %v511
          %v582 = vpack.c.bf16 %v513, %v513
          %v583 = vpack.c.bf16 %v516, %v516
          %v584 = vpack.c.bf16 %v518, %v518
          %585 = vst [vmem:[#allocation2] sm:$0xf] %v569
          %586 = vst [vmem:[#allocation2 + $0x4] sm:$0xf] %v570
          %587 = vst [vmem:[#allocation2 + $0x8] sm:$0xf] %v571
          %588 = vst [vmem:[#allocation2 + $0xc] sm:$0xf] %v572
          %589 = vst [vmem:[#allocation2 + $0x10] sm:$0xf] %v573
          %590 = vst [vmem:[#allocation2 + $0x14] sm:$0xf] %v574
          %591 = vst [vmem:[#allocation2 + $0x18] sm:$0xf] %v575
          %592 = vst [vmem:[#allocation2 + $0x1c] sm:$0xf] %v576
          %593 = vst [vmem:[#allocation2 + $0x20] sm:$0xf] %v577
          %594 = vst [vmem:[#allocation2 + $0x24] sm:$0xf] %v578
          %595 = vst [vmem:[#allocation2 + $0x28] sm:$0xf] %v579
          %596 = vst [vmem:[#allocation2 + $0x2c] sm:$0xf] %v580
          %597 = vst [vmem:[#allocation2 + $0x30] sm:$0xf] %v581
          %598 = vst [vmem:[#allocation2 + $0x34] sm:$0xf] %v582
          %599 = vst [vmem:[#allocation2 + $0x38] sm:$0xf] %v583
          %600 = vst [vmem:[#allocation2 + $0x3c] sm:$0xf] %v584
          %v601 = vpack.c.bf16 %v530, %v530
          %v602 = vpack.c.bf16 %v532, %v532
          %v603 = vpack.c.bf16 %v535, %v535
          %v604 = vpack.c.bf16 %v537, %v537
          %v605 = vpack.c.bf16 %v540, %v540
          %v606 = vpack.c.bf16 %v542, %v542
          %v607 = vpack.c.bf16 %v545, %v545
          %v608 = vpack.c.bf16 %v547, %v547
          %v609 = vpack.c.bf16 %v550, %v550
          %v610 = vpack.c.bf16 %v552, %v552
          %v611 = vpack.c.bf16 %v555, %v555
          %v612 = vpack.c.bf16 %v557, %v557
          %v613 = vpack.c.bf16 %v560, %v560
          %v614 = vpack.c.bf16 %v562, %v562
          %v615 = vpack.c.bf16 %v565, %v565
          %v616 = vpack.c.bf16 %v567, %v567
          %617 = vst [vmem:[#allocation3] sm:$0xf] %v601
          %618 = vst [vmem:[#allocation3 + $0x4] sm:$0xf] %v602
          %619 = vst [vmem:[#allocation3 + $0x8] sm:$0xf] %v603
          %620 = vst [vmem:[#allocation3 + $0xc] sm:$0xf] %v604
          %621 = vst [vmem:[#allocation3 + $0x10] sm:$0xf] %v605
          %622 = vst [vmem:[#allocation3 + $0x14] sm:$0xf] %v606
          %623 = vst [vmem:[#allocation3 + $0x18] sm:$0xf] %v607
          %624 = vst [vmem:[#allocation3 + $0x1c] sm:$0xf] %v608
          %625 = vst [vmem:[#allocation3 + $0x20] sm:$0xf] %v609
          %626 = vst [vmem:[#allocation3 + $0x24] sm:$0xf] %v610
          %627 = vst [vmem:[#allocation3 + $0x28] sm:$0xf] %v611
          %628 = vst [vmem:[#allocation3 + $0x2c] sm:$0xf] %v612
          %629 = vst [vmem:[#allocation3 + $0x30] sm:$0xf] %v613
          %630 = vst [vmem:[#allocation3 + $0x34] sm:$0xf] %v614
          %631 = vst [vmem:[#allocation3 + $0x38] sm:$0xf] %v615
          %632 = vst [vmem:[#allocation3 + $0x3c] sm:$0xf] %v616
          %633 = vst [vmem:[#allocation4] sm:$0xff] 0.0
          %634 = vst [vmem:[#allocation4 + $0x8] sm:$0xff] 0.0
          %635 = vst [vmem:[#allocation4 + $0x10] sm:$0xff] 0.0
          %636 = vst [vmem:[#allocation4 + $0x18] sm:$0xff] 0.0
          %637 = vst [vmem:[#allocation4 + $0x20] sm:$0xff] 0.0
          %638 = vst [vmem:[#allocation4 + $0x28] sm:$0xff] 0.0
          %639 = vst [vmem:[#allocation4 + $0x30] sm:$0xff] 0.0
          %640 = vst [vmem:[#allocation4 + $0x38] sm:$0xff] 0.0
          %641 = vst [vmem:[#allocation4 + $0x40] sm:$0xff] 0.0
          %642 = vst [vmem:[#allocation4 + $0x48] sm:$0xff] 0.0
          %643 = vst [vmem:[#allocation4 + $0x50] sm:$0xff] 0.0
          %644 = vst [vmem:[#allocation4 + $0x58] sm:$0xff] 0.0
          %645 = vst [vmem:[#allocation4 + $0x60] sm:$0xff] 0.0
          %646 = vst [vmem:[#allocation4 + $0x68] sm:$0xff] 0.0
          %647 = vst [vmem:[#allocation4 + $0x70] sm:$0xff] 0.0
          %648 = vst [vmem:[#allocation4 + $0x78] sm:$0xff] 0.0
        $region64: #{tpu_custom_call.1} parent=43 // pred_fallthru
          _
        // Predicated region
        $region65: #{tpu_custom_call.1} parent=43 // pred_check
          %p649 = pneg %p305
        $region66: #{tpu_custom_call.1} parent=43 // pred_check_branch
          %651 = sbr.rel (%p649) target = $region68
        $region67: #{tpu_custom_call.1} parent=43 // pred_region
          %v652 = vld [vmem:[#allocation4] sm:$0xff]
          %v653 = vld [vmem:[#allocation4 + $0x8] sm:$0xff]
          %v654 = vld [vmem:[#allocation4 + $0x10] sm:$0xff]
          %v655 = vld [vmem:[#allocation4 + $0x18] sm:$0xff]
          %v656 = vld [vmem:[#allocation4 + $0x20] sm:$0xff]
          %v657 = vld [vmem:[#allocation4 + $0x28] sm:$0xff]
          %v658 = vld [vmem:[#allocation4 + $0x30] sm:$0xff]
          %v659 = vld [vmem:[#allocation4 + $0x38] sm:$0xff]
          %v660 = vld [vmem:[#allocation4 + $0x40] sm:$0xff]
          %v661 = vld [vmem:[#allocation4 + $0x48] sm:$0xff]
          %v662 = vld [vmem:[#allocation4 + $0x50] sm:$0xff]
          %v663 = vld [vmem:[#allocation4 + $0x58] sm:$0xff]
          %v664 = vld [vmem:[#allocation4 + $0x60] sm:$0xff]
          %v665 = vld [vmem:[#allocation4 + $0x68] sm:$0xff]
          %v666 = vld [vmem:[#allocation4 + $0x70] sm:$0xff]
          %v667 = vld [vmem:[#allocation4 + $0x78] sm:$0xff]
          %v668 = vld [vmem:[#allocation9] sm:$0xf]
          %v669 = vld [vmem:[#allocation9 + $0x4] sm:$0xf]
          %v670 = vld [vmem:[#allocation9 + $0x8] sm:$0xf]
          %v671 = vld [vmem:[#allocation9 + $0xc] sm:$0xf]
          %v672 = vld [vmem:[#allocation9 + $0x10] sm:$0xf]
          %v673 = vld [vmem:[#allocation9 + $0x14] sm:$0xf]
          %v674 = vld [vmem:[#allocation9 + $0x18] sm:$0xf]
          %v675 = vld [vmem:[#allocation9 + $0x1c] sm:$0xf]
          %v676 = vld [vmem:[#allocation9 + $0x20] sm:$0xf]
          %v677 = vld [vmem:[#allocation9 + $0x24] sm:$0xf]
          %v678 = vld [vmem:[#allocation9 + $0x28] sm:$0xf]
          %v679 = vld [vmem:[#allocation9 + $0x2c] sm:$0xf]
          %v680 = vld [vmem:[#allocation9 + $0x30] sm:$0xf]
          %v681 = vld [vmem:[#allocation9 + $0x34] sm:$0xf]
          %v682 = vld [vmem:[#allocation9 + $0x38] sm:$0xf]
          %v683 = vld [vmem:[#allocation9 + $0x3c] sm:$0xf]
          %s684 = sshra.s32 %s304, 3
          %s685 = sand.u32 %s304, 7
          %s686 = smul.addr %s684, 4
          %s687 = scalar_lea.vmem [#allocation2], %s686
          %v688 = vld [vmem:[%s687] sm:$0xf]
          %v689 = vld [vmem:[%s687 + $0x4] sm:$0xf]
          %v690 = vld [vmem:[%s687 + $0x8] sm:$0xf]
          %v691 = vld [vmem:[%s687 + $0xc] sm:$0xf]
          %v692 = vld [vmem:[%s687 + $0x10] sm:$0xf]
          %v693 = vld [vmem:[%s687 + $0x14] sm:$0xf]
          %v694 = vld [vmem:[%s687 + $0x18] sm:$0xf]
          %v695 = vld [vmem:[%s687 + $0x1c] sm:$0xf]
          %v696 = vld [vmem:[%s687 + $0x20] sm:$0xf]
          %v697 = vld [vmem:[%s687 + $0x24] sm:$0xf]
          %v698 = vld [vmem:[%s687 + $0x28] sm:$0xf]
          %v699 = vld [vmem:[%s687 + $0x2c] sm:$0xf]
          %v700 = vld [vmem:[%s687 + $0x30] sm:$0xf]
          %v701 = vld [vmem:[%s687 + $0x34] sm:$0xf]
          %v702 = vld [vmem:[%s687 + $0x38] sm:$0xf]
          %v703 = vld [vmem:[%s687 + $0x3c] sm:$0xf]
          %v720 = vunpack.c.l.b16 %v668
          %v721 = vunpack.c.l.b16 %v669
          %v722 = vunpack.c.l.b16 %v670
          %v723 = vunpack.c.l.b16 %v671
          %v724 = vunpack.c.l.b16 %v672
          %v725 = vunpack.c.l.b16 %v673
          %v726 = vunpack.c.l.b16 %v674
          %v727 = vunpack.c.l.b16 %v675
          %v728 = vunpack.c.l.b16 %v676
          %v729 = vunpack.c.l.b16 %v677
          %v730 = vunpack.c.l.b16 %v678
          %v731 = vunpack.c.l.b16 %v679
          %v732 = vunpack.c.l.b16 %v680
          %v733 = vunpack.c.l.b16 %v681
          %v734 = vunpack.c.l.b16 %v682
          %v735 = vunpack.c.l.b16 %v683
          %v736 = vpack.c.b16 %v721, %v720
          %v737 = vpack.c.b16 %v723, %v722
          %v738 = vpack.c.b16 %v725, %v724
          %v739 = vpack.c.b16 %v727, %v726
          %v740 = vpack.c.b16 %v729, %v728
          %v741 = vpack.c.b16 %v731, %v730
          %v742 = vpack.c.b16 %v733, %v732
          %v743 = vpack.c.b16 %v735, %v734
          %v768 = vunpack.c.l.b16 %v688
          %v769 = vunpack.c.l.b16 %v689
          %v770 = vunpack.c.l.b16 %v690
          %v771 = vunpack.c.l.b16 %v691
          %v772 = vunpack.c.l.b16 %v692
          %v773 = vunpack.c.l.b16 %v693
          %v774 = vunpack.c.l.b16 %v694
          %v775 = vunpack.c.l.b16 %v695
          %v776 = vunpack.c.l.b16 %v696
          %v777 = vunpack.c.l.b16 %v697
          %v778 = vunpack.c.l.b16 %v698
          %v779 = vunpack.c.l.b16 %v699
          %v780 = vunpack.c.l.b16 %v700
          %v781 = vunpack.c.l.b16 %v701
          %v782 = vunpack.c.l.b16 %v702
          %v783 = vunpack.c.l.b16 %v703
          %v784 = vpack.c.b16 %v769, %v768
          %v785 = vpack.c.b16 %v771, %v770
          %v786 = vpack.c.b16 %v773, %v772
          %v787 = vpack.c.b16 %v775, %v774
          %v788 = vpack.c.b16 %v777, %v776
          %v789 = vpack.c.b16 %v779, %v778
          %v790 = vpack.c.b16 %v781, %v780
          %v791 = vpack.c.b16 %v783, %v782
          %800 = vmatpush.bf16.msra.mxu0 %v791
          %801 = vmatpush.bf16.msra.mxu0 %v790
          %802 = vmatpush.bf16.msra.mxu0 %v789
          %803 = vmatpush.bf16.msra.mxu0 %v788
          %804 = vmatpush.bf16.msra.mxu0 %v787
          %805 = vmatpush.bf16.msra.mxu0 %v786
          %806 = vmatpush.bf16.msra.mxu0 %v785
          %807 = vmatpush.bf16.msra.mxu0 %v784
          %808 = vmatmul.bf16.gmra.mxu0 %v736
          %v809 = vpop.f32.mrf.mxu0
          %v810 = vadd.f32 0.0, %v809
          %v811 = vpop.f32.mrf.mxu0
          %v812 = vadd.f32 0.0, %v811
          %813 = vmatmul.bf16.gmra.mxu0 %v737
          %v814 = vpop.f32.mrf.mxu0
          %v815 = vadd.f32 0.0, %v814
          %v816 = vpop.f32.mrf.mxu0
          %v817 = vadd.f32 0.0, %v816
          %818 = vmatmul.bf16.gmra.mxu0 %v738
          %v819 = vpop.f32.mrf.mxu0
          %v820 = vadd.f32 0.0, %v819
          %v821 = vpop.f32.mrf.mxu0
          %v822 = vadd.f32 0.0, %v821
          %823 = vmatmul.bf16.gmra.mxu0 %v739
          %v824 = vpop.f32.mrf.mxu0
          %v825 = vadd.f32 0.0, %v824
          %v826 = vpop.f32.mrf.mxu0
          %v827 = vadd.f32 0.0, %v826
          %828 = vmatmul.bf16.gmra.mxu0 %v740
          %v829 = vpop.f32.mrf.mxu0
          %v830 = vadd.f32 0.0, %v829
          %v831 = vpop.f32.mrf.mxu0
          %v832 = vadd.f32 0.0, %v831
          %833 = vmatmul.bf16.gmra.mxu0 %v741
          %v834 = vpop.f32.mrf.mxu0
          %v835 = vadd.f32 0.0, %v834
          %v836 = vpop.f32.mrf.mxu0
          %v837 = vadd.f32 0.0, %v836
          %838 = vmatmul.bf16.gmra.mxu0 %v742
          %v839 = vpop.f32.mrf.mxu0
          %v840 = vadd.f32 0.0, %v839
          %v841 = vpop.f32.mrf.mxu0
          %v842 = vadd.f32 0.0, %v841
          %843 = vmatmul.bf16.gmra.mxu0 %v743
          %v844 = vpop.f32.mrf.mxu0
          %v845 = vadd.f32 0.0, %v844
          %v846 = vpop.f32.mrf.mxu0
          %v847 = vadd.f32 0.0, %v846
          %848 = vdwg.mxu0
          %v849 = vadd.f32 %v652, %v810
          %v850 = vadd.f32 %v653, %v812
          %v851 = vadd.f32 %v654, %v815
          %v852 = vadd.f32 %v655, %v817
          %v853 = vadd.f32 %v656, %v820
          %v854 = vadd.f32 %v657, %v822
          %v855 = vadd.f32 %v658, %v825
          %v856 = vadd.f32 %v659, %v827
          %v857 = vadd.f32 %v660, %v830
          %v858 = vadd.f32 %v661, %v832
          %v859 = vadd.f32 %v662, %v835
          %v860 = vadd.f32 %v663, %v837
          %v861 = vadd.f32 %v664, %v840
          %v862 = vadd.f32 %v665, %v842
          %v863 = vadd.f32 %v666, %v845
          %v864 = vadd.f32 %v667, %v847
          %865 = vst [vmem:[#allocation4] sm:$0xff] %v849
          %866 = vst [vmem:[#allocation4 + $0x8] sm:$0xff] %v850
          %867 = vst [vmem:[#allocation4 + $0x10] sm:$0xff] %v851
          %868 = vst [vmem:[#allocation4 + $0x18] sm:$0xff] %v852
          %869 = vst [vmem:[#allocation4 + $0x20] sm:$0xff] %v853
          %870 = vst [vmem:[#allocation4 + $0x28] sm:$0xff] %v854
          %871 = vst [vmem:[#allocation4 + $0x30] sm:$0xff] %v855
          %872 = vst [vmem:[#allocation4 + $0x38] sm:$0xff] %v856
          %873 = vst [vmem:[#allocation4 + $0x40] sm:$0xff] %v857
          %874 = vst [vmem:[#allocation4 + $0x48] sm:$0xff] %v858
          %875 = vst [vmem:[#allocation4 + $0x50] sm:$0xff] %v859
          %876 = vst [vmem:[#allocation4 + $0x58] sm:$0xff] %v860
          %877 = vst [vmem:[#allocation4 + $0x60] sm:$0xff] %v861
          %878 = vst [vmem:[#allocation4 + $0x68] sm:$0xff] %v862
          %879 = vst [vmem:[#allocation4 + $0x70] sm:$0xff] %v863
          %880 = vst [vmem:[#allocation4 + $0x78] sm:$0xff] %v864
        $region68: #{tpu_custom_call.1} parent=43 // pred_fallthru
          _
        // Predicated region
        $region69: #{tpu_custom_call.1} parent=43 // pred_check
          _
        $region70: #{tpu_custom_call.1} parent=43 // pred_check_branch
          %882 = sbr.rel (%p307) target = $region72
        $region71: #{tpu_custom_call.1} parent=43 // pred_region
          %v883 = vld [vmem:[#allocation4] sm:$0xff]
          %v884 = vld [vmem:[#allocation4 + $0x8] sm:$0xff]
          %v885 = vld [vmem:[#allocation4 + $0x10] sm:$0xff]
          %v886 = vld [vmem:[#allocation4 + $0x18] sm:$0xff]
          %v887 = vld [vmem:[#allocation4 + $0x20] sm:$0xff]
          %v888 = vld [vmem:[#allocation4 + $0x28] sm:$0xff]
          %v889 = vld [vmem:[#allocation4 + $0x30] sm:$0xff]
          %v890 = vld [vmem:[#allocation4 + $0x38] sm:$0xff]
          %v891 = vld [vmem:[#allocation4 + $0x40] sm:$0xff]
          %v892 = vld [vmem:[#allocation4 + $0x48] sm:$0xff]
          %v893 = vld [vmem:[#allocation4 + $0x50] sm:$0xff]
          %v894 = vld [vmem:[#allocation4 + $0x58] sm:$0xff]
          %v895 = vld [vmem:[#allocation4 + $0x60] sm:$0xff]
          %v896 = vld [vmem:[#allocation4 + $0x68] sm:$0xff]
          %v897 = vld [vmem:[#allocation4 + $0x70] sm:$0xff]
          %v898 = vld [vmem:[#allocation4 + $0x78] sm:$0xff]
          %v899 = vld [vmem:[#allocation3] sm:$0xf]
          %v900 = vld [vmem:[#allocation3 + $0x4] sm:$0xf]
          %v901 = vld [vmem:[#allocation3 + $0x8] sm:$0xf]
          %v902 = vld [vmem:[#allocation3 + $0xc] sm:$0xf]
          %v903 = vld [vmem:[#allocation3 + $0x10] sm:$0xf]
          %v904 = vld [vmem:[#allocation3 + $0x14] sm:$0xf]
          %v905 = vld [vmem:[#allocation3 + $0x18] sm:$0xf]
          %v906 = vld [vmem:[#allocation3 + $0x1c] sm:$0xf]
          %v907 = vld [vmem:[#allocation3 + $0x20] sm:$0xf]
          %v908 = vld [vmem:[#allocation3 + $0x24] sm:$0xf]
          %v909 = vld [vmem:[#allocation3 + $0x28] sm:$0xf]
          %v910 = vld [vmem:[#allocation3 + $0x2c] sm:$0xf]
          %v911 = vld [vmem:[#allocation3 + $0x30] sm:$0xf]
          %v912 = vld [vmem:[#allocation3 + $0x34] sm:$0xf]
          %v913 = vld [vmem:[#allocation3 + $0x38] sm:$0xf]
          %v914 = vld [vmem:[#allocation3 + $0x3c] sm:$0xf]
          %v915 = vunpack.c.l.bf16 %v899
          %v916 = vunpack.c.l.bf16 %v900
          %v917 = vunpack.c.l.bf16 %v901
          %v918 = vunpack.c.l.bf16 %v902
          %v919 = vunpack.c.l.bf16 %v903
          %v920 = vunpack.c.l.bf16 %v904
          %v921 = vunpack.c.l.bf16 %v905
          %v922 = vunpack.c.l.bf16 %v906
          %v923 = vunpack.c.l.bf16 %v907
          %v924 = vunpack.c.l.bf16 %v908
          %v925 = vunpack.c.l.bf16 %v909
          %v926 = vunpack.c.l.bf16 %v910
          %v927 = vunpack.c.l.bf16 %v911
          %v928 = vunpack.c.l.bf16 %v912
          %v929 = vunpack.c.l.bf16 %v913
          %v930 = vunpack.c.l.bf16 %v914
          %v931 = vadd.f32 %v883, %v915
          %v932 = vadd.f32 %v884, %v916
          %v933 = vadd.f32 %v885, %v917
          %v934 = vadd.f32 %v886, %v918
          %v935 = vadd.f32 %v887, %v919
          %v936 = vadd.f32 %v888, %v920
          %v937 = vadd.f32 %v889, %v921
          %v938 = vadd.f32 %v890, %v922
          %v939 = vadd.f32 %v891, %v923
          %v940 = vadd.f32 %v892, %v924
          %v941 = vadd.f32 %v893, %v925
          %v942 = vadd.f32 %v894, %v926
          %v943 = vadd.f32 %v895, %v927
          %v944 = vadd.f32 %v896, %v928
          %v945 = vadd.f32 %v897, %v929
          %v946 = vadd.f32 %v898, %v930
          %v947 = vld [vmem:[%s3] sm:$0x1]
          %v949 = vperm.slane %v947, 0
          %v951 = vadd.f32 %v931, %v949
          %v952 = vadd.f32 %v932, %v949
          %v953 = vadd.f32 %v933, %v949
          %v954 = vadd.f32 %v934, %v949
          %v955 = vadd.f32 %v935, %v949
          %v956 = vadd.f32 %v936, %v949
          %v957 = vadd.f32 %v937, %v949
          %v958 = vadd.f32 %v938, %v949
          %v959 = vadd.f32 %v939, %v949
          %v960 = vadd.f32 %v940, %v949
          %v961 = vadd.f32 %v941, %v949
          %v962 = vadd.f32 %v942, %v949
          %v963 = vadd.f32 %v943, %v949
          %v964 = vadd.f32 %v944, %v949
          %v965 = vadd.f32 %v945, %v949
          %v966 = vadd.f32 %v946, %v949
          %v967 = vmax.f32 %v951, 0.0
          %v968 = vmax.f32 %v952, 0.0
          %v969 = vmax.f32 %v953, 0.0
          %v970 = vmax.f32 %v954, 0.0
          %v971 = vmax.f32 %v955, 0.0
          %v972 = vmax.f32 %v956, 0.0
          %v973 = vmax.f32 %v957, 0.0
          %v974 = vmax.f32 %v958, 0.0
          %v975 = vmax.f32 %v959, 0.0
          %v976 = vmax.f32 %v960, 0.0
          %v977 = vmax.f32 %v961, 0.0
          %v978 = vmax.f32 %v962, 0.0
          %v979 = vmax.f32 %v963, 0.0
          %v980 = vmax.f32 %v964, 0.0
          %v981 = vmax.f32 %v965, 0.0
          %v982 = vmax.f32 %v966, 0.0
          %v983 = vpack.c.bf16 %v967, %v967
          %v984 = vpack.c.bf16 %v968, %v968
          %v985 = vpack.c.bf16 %v969, %v969
          %v986 = vpack.c.bf16 %v970, %v970
          %v987 = vpack.c.bf16 %v971, %v971
          %v988 = vpack.c.bf16 %v972, %v972
          %v989 = vpack.c.bf16 %v973, %v973
          %v990 = vpack.c.bf16 %v974, %v974
          %v991 = vpack.c.bf16 %v975, %v975
          %v992 = vpack.c.bf16 %v976, %v976
          %v993 = vpack.c.bf16 %v977, %v977
          %v994 = vpack.c.bf16 %v978, %v978
          %v995 = vpack.c.bf16 %v979, %v979
          %v996 = vpack.c.bf16 %v980, %v980
          %v997 = vpack.c.bf16 %v981, %v981
          %v998 = vpack.c.bf16 %v982, %v982
          %999 = vst [vmem:[#allocation5] sm:$0xf] %v983
          %1000 = vst [vmem:[#allocation5 + $0x4] sm:$0xf] %v984
          %1001 = vst [vmem:[#allocation5 + $0x8] sm:$0xf] %v985
          %1002 = vst [vmem:[#allocation5 + $0xc] sm:$0xf] %v986
          %1003 = vst [vmem:[#allocation5 + $0x10] sm:$0xf] %v987
          %1004 = vst [vmem:[#allocation5 + $0x14] sm:$0xf] %v988
          %1005 = vst [vmem:[#allocation5 + $0x18] sm:$0xf] %v989
          %1006 = vst [vmem:[#allocation5 + $0x1c] sm:$0xf] %v990
          %1007 = vst [vmem:[#allocation5 + $0x20] sm:$0xf] %v991
          %1008 = vst [vmem:[#allocation5 + $0x24] sm:$0xf] %v992
          %1009 = vst [vmem:[#allocation5 + $0x28] sm:$0xf] %v993
          %1010 = vst [vmem:[#allocation5 + $0x2c] sm:$0xf] %v994
          %1011 = vst [vmem:[#allocation5 + $0x30] sm:$0xf] %v995
          %1012 = vst [vmem:[#allocation5 + $0x34] sm:$0xf] %v996
          %1013 = vst [vmem:[#allocation5 + $0x38] sm:$0xf] %v997
          %1014 = vst [vmem:[#allocation5 + $0x3c] sm:$0xf] %v998
        $region72: #{tpu_custom_call.1} parent=43 // pred_fallthru
          _
        %p1015 = scmp.eq.s32.totalorder %s25, 1
        %p1016 = pnand %p1015, %p306
        %p1017 = pneg %p1016
        // Predicated region
        $region73: #{tpu_custom_call.1} parent=43 // pred_check
          _
        $region74: #{tpu_custom_call.1} parent=43 // pred_check_branch
          %1019 = sbr.rel (%p1016) target = $region76
        $region75: #{tpu_custom_call.1} parent=43 // pred_region
          %v1020 = vld [vmem:[#allocation5] sm:$0xf]
          %v1021 = vld [vmem:[#allocation5 + $0x4] sm:$0xf]
          %v1022 = vld [vmem:[#allocation5 + $0x8] sm:$0xf]
          %v1023 = vld [vmem:[#allocation5 + $0xc] sm:$0xf]
          %v1024 = vld [vmem:[#allocation5 + $0x10] sm:$0xf]
          %v1025 = vld [vmem:[#allocation5 + $0x14] sm:$0xf]
          %v1026 = vld [vmem:[#allocation5 + $0x18] sm:$0xf]
          %v1027 = vld [vmem:[#allocation5 + $0x1c] sm:$0xf]
          %v1028 = vld [vmem:[#allocation5 + $0x20] sm:$0xf]
          %v1029 = vld [vmem:[#allocation5 + $0x24] sm:$0xf]
          %v1030 = vld [vmem:[#allocation5 + $0x28] sm:$0xf]
          %v1031 = vld [vmem:[#allocation5 + $0x2c] sm:$0xf]
          %v1032 = vld [vmem:[#allocation5 + $0x30] sm:$0xf]
          %v1033 = vld [vmem:[#allocation5 + $0x34] sm:$0xf]
          %v1034 = vld [vmem:[#allocation5 + $0x38] sm:$0xf]
          %v1035 = vld [vmem:[#allocation5 + $0x3c] sm:$0xf]
          %v1036 = vld [vmem:[#allocation15] sm:$0xff]
          %v1037 = vld [vmem:[#allocation15 + $0x8] sm:$0xff]
          %v1038 = vld [vmem:[#allocation15 + $0x10] sm:$0xff]
          %v1039 = vld [vmem:[#allocation15 + $0x18] sm:$0xff]
          %v1040 = vld [vmem:[#allocation15 + $0x20] sm:$0xff]
          %v1041 = vld [vmem:[#allocation15 + $0x28] sm:$0xff]
          %v1042 = vld [vmem:[#allocation15 + $0x30] sm:$0xff]
          %v1043 = vld [vmem:[#allocation15 + $0x38] sm:$0xff]
          %v1044 = vld [vmem:[#allocation15 + $0x40] sm:$0xff]
          %v1045 = vld [vmem:[#allocation15 + $0x48] sm:$0xff]
          %v1046 = vld [vmem:[#allocation15 + $0x50] sm:$0xff]
          %v1047 = vld [vmem:[#allocation15 + $0x58] sm:$0xff]
          %v1048 = vld [vmem:[#allocation15 + $0x60] sm:$0xff]
          %v1049 = vld [vmem:[#allocation15 + $0x68] sm:$0xff]
          %v1050 = vld [vmem:[#allocation15 + $0x70] sm:$0xff]
          %v1051 = vld [vmem:[#allocation15 + $0x78] sm:$0xff]
          %v1068 = vunpack.c.l.b16 %v1020
          %v1069 = vunpack.c.l.b16 %v1021
          %v1070 = vunpack.c.l.b16 %v1022
          %v1071 = vunpack.c.l.b16 %v1023
          %v1072 = vunpack.c.l.b16 %v1024
          %v1073 = vunpack.c.l.b16 %v1025
          %v1074 = vunpack.c.l.b16 %v1026
          %v1075 = vunpack.c.l.b16 %v1027
          %v1076 = vunpack.c.l.b16 %v1028
          %v1077 = vunpack.c.l.b16 %v1029
          %v1078 = vunpack.c.l.b16 %v1030
          %v1079 = vunpack.c.l.b16 %v1031
          %v1080 = vunpack.c.l.b16 %v1032
          %v1081 = vunpack.c.l.b16 %v1033
          %v1082 = vunpack.c.l.b16 %v1034
          %v1083 = vunpack.c.l.b16 %v1035
          %v1084 = vpack.c.b16 %v1069, %v1068
          %v1085 = vpack.c.b16 %v1071, %v1070
          %v1086 = vpack.c.b16 %v1073, %v1072
          %v1087 = vpack.c.b16 %v1075, %v1074
          %v1088 = vpack.c.b16 %v1077, %v1076
          %v1089 = vpack.c.b16 %v1079, %v1078
          %v1090 = vpack.c.b16 %v1081, %v1080
          %v1091 = vpack.c.b16 %v1083, %v1082
          %v1116 = vunpack.c.l.b16 %v1036
          %v1117 = vunpack.c.h.b16 %v1036
          %v1118 = vunpack.c.l.b16 %v1037
          %v1119 = vunpack.c.h.b16 %v1037
          %v1120 = vunpack.c.l.b16 %v1038
          %v1121 = vunpack.c.h.b16 %v1038
          %v1122 = vunpack.c.l.b16 %v1039
          %v1123 = vunpack.c.h.b16 %v1039
          %v1124 = vunpack.c.l.b16 %v1040
          %v1125 = vunpack.c.h.b16 %v1040
          %v1126 = vunpack.c.l.b16 %v1041
          %v1127 = vunpack.c.h.b16 %v1041
          %v1128 = vunpack.c.l.b16 %v1042
          %v1129 = vunpack.c.h.b16 %v1042
          %v1130 = vunpack.c.l.b16 %v1043
          %v1131 = vunpack.c.h.b16 %v1043
          %v1132 = vunpack.c.l.b16 %v1044
          %v1133 = vunpack.c.h.b16 %v1044
          %v1134 = vunpack.c.l.b16 %v1045
          %v1135 = vunpack.c.h.b16 %v1045
          %v1136 = vunpack.c.l.b16 %v1046
          %v1137 = vunpack.c.h.b16 %v1046
          %v1138 = vunpack.c.l.b16 %v1047
          %v1139 = vunpack.c.h.b16 %v1047
          %v1140 = vunpack.c.l.b16 %v1048
          %v1141 = vunpack.c.h.b16 %v1048
          %v1142 = vunpack.c.l.b16 %v1049
          %v1143 = vunpack.c.h.b16 %v1049
          %v1144 = vunpack.c.l.b16 %v1050
          %v1145 = vunpack.c.h.b16 %v1050
          %v1146 = vunpack.c.l.b16 %v1051
          %v1147 = vunpack.c.h.b16 %v1051
          %v1148 = vpack.c.b16 %v1118, %v1116
          %v1149 = vpack.c.b16 %v1119, %v1117
          %v1150 = vpack.c.b16 %v1122, %v1120
          %v1151 = vpack.c.b16 %v1123, %v1121
          %v1152 = vpack.c.b16 %v1126, %v1124
          %v1153 = vpack.c.b16 %v1127, %v1125
          %v1154 = vpack.c.b16 %v1130, %v1128
          %v1155 = vpack.c.b16 %v1131, %v1129
          %v1156 = vpack.c.b16 %v1134, %v1132
          %v1157 = vpack.c.b16 %v1135, %v1133
          %v1158 = vpack.c.b16 %v1138, %v1136
          %v1159 = vpack.c.b16 %v1139, %v1137
          %v1160 = vpack.c.b16 %v1142, %v1140
          %v1161 = vpack.c.b16 %v1143, %v1141
          %v1162 = vpack.c.b16 %v1146, %v1144
          %v1163 = vpack.c.b16 %v1147, %v1145
          %1180 = vmatpush.bf16.msra.mxu0 %v1162
          %1181 = vmatpush.bf16.msra.mxu0 %v1160
          %1182 = vmatpush.bf16.msra.mxu0 %v1158
          %1183 = vmatpush.bf16.msra.mxu0 %v1156
          %1184 = vmatpush.bf16.msra.mxu0 %v1154
          %1185 = vmatpush.bf16.msra.mxu0 %v1152
          %1186 = vmatpush.bf16.msra.mxu0 %v1150
          %1187 = vmatpush.bf16.msra.mxu0 %v1148
          %1188 = vmatmul.bf16.gmra.mxu0 %v1084
          %v1189 = vpop.f32.mrf.mxu0
          %v1190 = vadd.f32 0.0, %v1189
          %v1191 = vpop.f32.mrf.mxu0
          %v1192 = vadd.f32 0.0, %v1191
          %1193 = vmatmul.bf16.gmra.mxu0 %v1085
          %v1194 = vpop.f32.mrf.mxu0
          %v1195 = vadd.f32 0.0, %v1194
          %v1196 = vpop.f32.mrf.mxu0
          %v1197 = vadd.f32 0.0, %v1196
          %1198 = vmatmul.bf16.gmra.mxu0 %v1086
          %v1199 = vpop.f32.mrf.mxu0
          %v1200 = vadd.f32 0.0, %v1199
          %v1201 = vpop.f32.mrf.mxu0
          %v1202 = vadd.f32 0.0, %v1201
          %1203 = vmatmul.bf16.gmra.mxu0 %v1087
          %v1204 = vpop.f32.mrf.mxu0
          %v1205 = vadd.f32 0.0, %v1204
          %v1206 = vpop.f32.mrf.mxu0
          %v1207 = vadd.f32 0.0, %v1206
          %1208 = vmatmul.bf16.gmra.mxu0 %v1088
          %v1209 = vpop.f32.mrf.mxu0
          %v1210 = vadd.f32 0.0, %v1209
          %v1211 = vpop.f32.mrf.mxu0
          %v1212 = vadd.f32 0.0, %v1211
          %1213 = vmatmul.bf16.gmra.mxu0 %v1089
          %v1214 = vpop.f32.mrf.mxu0
          %v1215 = vadd.f32 0.0, %v1214
          %v1216 = vpop.f32.mrf.mxu0
          %v1217 = vadd.f32 0.0, %v1216
          %1218 = vmatmul.bf16.gmra.mxu0 %v1090
          %v1219 = vpop.f32.mrf.mxu0
          %v1220 = vadd.f32 0.0, %v1219
          %v1221 = vpop.f32.mrf.mxu0
          %v1222 = vadd.f32 0.0, %v1221
          %1223 = vmatmul.bf16.gmra.mxu0 %v1091
          %v1224 = vpop.f32.mrf.mxu0
          %v1225 = vadd.f32 0.0, %v1224
          %v1226 = vpop.f32.mrf.mxu0
          %v1227 = vadd.f32 0.0, %v1226
          %1228 = vdwg.mxu0
          %1229 = vmatpush.bf16.msra.mxu0 %v1163
          %1230 = vmatpush.bf16.msra.mxu0 %v1161
          %1231 = vmatpush.bf16.msra.mxu0 %v1159
          %1232 = vmatpush.bf16.msra.mxu0 %v1157
          %1233 = vmatpush.bf16.msra.mxu0 %v1155
          %1234 = vmatpush.bf16.msra.mxu0 %v1153
          %1235 = vmatpush.bf16.msra.mxu0 %v1151
          %1236 = vmatpush.bf16.msra.mxu0 %v1149
          %1237 = vmatmul.bf16.gmra.mxu0 %v1084
          %v1238 = vpop.f32.mrf.mxu0
          %v1239 = vadd.f32 0.0, %v1238
          %v1240 = vpop.f32.mrf.mxu0
          %v1241 = vadd.f32 0.0, %v1240
          %1242 = vmatmul.bf16.gmra.mxu0 %v1085
          %v1243 = vpop.f32.mrf.mxu0
          %v1244 = vadd.f32 0.0, %v1243
          %v1245 = vpop.f32.mrf.mxu0
          %v1246 = vadd.f32 0.0, %v1245
          %1247 = vmatmul.bf16.gmra.mxu0 %v1086
          %v1248 = vpop.f32.mrf.mxu0
          %v1249 = vadd.f32 0.0, %v1248
          %v1250 = vpop.f32.mrf.mxu0
          %v1251 = vadd.f32 0.0, %v1250
          %1252 = vmatmul.bf16.gmra.mxu0 %v1087
          %v1253 = vpop.f32.mrf.mxu0
          %v1254 = vadd.f32 0.0, %v1253
          %v1255 = vpop.f32.mrf.mxu0
          %v1256 = vadd.f32 0.0, %v1255
          %1257 = vmatmul.bf16.gmra.mxu0 %v1088
          %v1258 = vpop.f32.mrf.mxu0
          %v1259 = vadd.f32 0.0, %v1258
          %v1260 = vpop.f32.mrf.mxu0
          %v1261 = vadd.f32 0.0, %v1260
          %1262 = vmatmul.bf16.gmra.mxu0 %v1089
          %v1263 = vpop.f32.mrf.mxu0
          %v1264 = vadd.f32 0.0, %v1263
          %v1265 = vpop.f32.mrf.mxu0
          %v1266 = vadd.f32 0.0, %v1265
          %1267 = vmatmul.bf16.gmra.mxu0 %v1090
          %v1268 = vpop.f32.mrf.mxu0
          %v1269 = vadd.f32 0.0, %v1268
          %v1270 = vpop.f32.mrf.mxu0
          %v1271 = vadd.f32 0.0, %v1270
          %1272 = vmatmul.bf16.gmra.mxu0 %v1091
          %v1273 = vpop.f32.mrf.mxu0
          %v1274 = vadd.f32 0.0, %v1273
          %v1275 = vpop.f32.mrf.mxu0
          %v1276 = vadd.f32 0.0, %v1275
          %1277 = vdwg.mxu0
          %v1278 = vpack.c.bf16 %v1190, %v1190
          %v1279 = vpack.c.bf16 %v1192, %v1192
          %v1280 = vpack.c.bf16 %v1195, %v1195
          %v1281 = vpack.c.bf16 %v1197, %v1197
          %v1282 = vpack.c.bf16 %v1200, %v1200
          %v1283 = vpack.c.bf16 %v1202, %v1202
          %v1284 = vpack.c.bf16 %v1205, %v1205
          %v1285 = vpack.c.bf16 %v1207, %v1207
          %v1286 = vpack.c.bf16 %v1210, %v1210
          %v1287 = vpack.c.bf16 %v1212, %v1212
          %v1288 = vpack.c.bf16 %v1215, %v1215
          %v1289 = vpack.c.bf16 %v1217, %v1217
          %v1290 = vpack.c.bf16 %v1220, %v1220
          %v1291 = vpack.c.bf16 %v1222, %v1222
          %v1292 = vpack.c.bf16 %v1225, %v1225
          %v1293 = vpack.c.bf16 %v1227, %v1227
          %1294 = vst [vmem:[#allocation6] sm:$0xf] %v1278
          %1295 = vst [vmem:[#allocation6 + $0x4] sm:$0xf] %v1279
          %1296 = vst [vmem:[#allocation6 + $0x8] sm:$0xf] %v1280
          %1297 = vst [vmem:[#allocation6 + $0xc] sm:$0xf] %v1281
          %1298 = vst [vmem:[#allocation6 + $0x10] sm:$0xf] %v1282
          %1299 = vst [vmem:[#allocation6 + $0x14] sm:$0xf] %v1283
          %1300 = vst [vmem:[#allocation6 + $0x18] sm:$0xf] %v1284
          %1301 = vst [vmem:[#allocation6 + $0x1c] sm:$0xf] %v1285
          %1302 = vst [vmem:[#allocation6 + $0x20] sm:$0xf] %v1286
          %1303 = vst [vmem:[#allocation6 + $0x24] sm:$0xf] %v1287
          %1304 = vst [vmem:[#allocation6 + $0x28] sm:$0xf] %v1288
          %1305 = vst [vmem:[#allocation6 + $0x2c] sm:$0xf] %v1289
          %1306 = vst [vmem:[#allocation6 + $0x30] sm:$0xf] %v1290
          %1307 = vst [vmem:[#allocation6 + $0x34] sm:$0xf] %v1291
          %1308 = vst [vmem:[#allocation6 + $0x38] sm:$0xf] %v1292
          %1309 = vst [vmem:[#allocation6 + $0x3c] sm:$0xf] %v1293
          %v1310 = vpack.c.bf16 %v1239, %v1239
          %v1311 = vpack.c.bf16 %v1241, %v1241
          %v1312 = vpack.c.bf16 %v1244, %v1244
          %v1313 = vpack.c.bf16 %v1246, %v1246
          %v1314 = vpack.c.bf16 %v1249, %v1249
          %v1315 = vpack.c.bf16 %v1251, %v1251
          %v1316 = vpack.c.bf16 %v1254, %v1254
          %v1317 = vpack.c.bf16 %v1256, %v1256
          %v1318 = vpack.c.bf16 %v1259, %v1259
          %v1319 = vpack.c.bf16 %v1261, %v1261
          %v1320 = vpack.c.bf16 %v1264, %v1264
          %v1321 = vpack.c.bf16 %v1266, %v1266
          %v1322 = vpack.c.bf16 %v1269, %v1269
          %v1323 = vpack.c.bf16 %v1271, %v1271
          %v1324 = vpack.c.bf16 %v1274, %v1274
          %v1325 = vpack.c.bf16 %v1276, %v1276
          %1326 = vst [vmem:[#allocation7] sm:$0xf] %v1310
          %1327 = vst [vmem:[#allocation7 + $0x4] sm:$0xf] %v1311
          %1328 = vst [vmem:[#allocation7 + $0x8] sm:$0xf] %v1312
          %1329 = vst [vmem:[#allocation7 + $0xc] sm:$0xf] %v1313
          %1330 = vst [vmem:[#allocation7 + $0x10] sm:$0xf] %v1314
          %1331 = vst [vmem:[#allocation7 + $0x14] sm:$0xf] %v1315
          %1332 = vst [vmem:[#allocation7 + $0x18] sm:$0xf] %v1316
          %1333 = vst [vmem:[#allocation7 + $0x1c] sm:$0xf] %v1317
          %1334 = vst [vmem:[#allocation7 + $0x20] sm:$0xf] %v1318
          %1335 = vst [vmem:[#allocation7 + $0x24] sm:$0xf] %v1319
          %1336 = vst [vmem:[#allocation7 + $0x28] sm:$0xf] %v1320
          %1337 = vst [vmem:[#allocation7 + $0x2c] sm:$0xf] %v1321
          %1338 = vst [vmem:[#allocation7 + $0x30] sm:$0xf] %v1322
          %1339 = vst [vmem:[#allocation7 + $0x34] sm:$0xf] %v1323
          %1340 = vst [vmem:[#allocation7 + $0x38] sm:$0xf] %v1324
          %1341 = vst [vmem:[#allocation7 + $0x3c] sm:$0xf] %v1325
          %1342 = vst [vmem:[#allocation8] sm:$0xff] 0.0
          %1343 = vst [vmem:[#allocation8 + $0x8] sm:$0xff] 0.0
          %1344 = vst [vmem:[#allocation8 + $0x10] sm:$0xff] 0.0
          %1345 = vst [vmem:[#allocation8 + $0x18] sm:$0xff] 0.0
          %1346 = vst [vmem:[#allocation8 + $0x20] sm:$0xff] 0.0
          %1347 = vst [vmem:[#allocation8 + $0x28] sm:$0xff] 0.0
          %1348 = vst [vmem:[#allocation8 + $0x30] sm:$0xff] 0.0
          %1349 = vst [vmem:[#allocation8 + $0x38] sm:$0xff] 0.0
          %1350 = vst [vmem:[#allocation8 + $0x40] sm:$0xff] 0.0
          %1351 = vst [vmem:[#allocation8 + $0x48] sm:$0xff] 0.0
          %1352 = vst [vmem:[#allocation8 + $0x50] sm:$0xff] 0.0
          %1353 = vst [vmem:[#allocation8 + $0x58] sm:$0xff] 0.0
          %1354 = vst [vmem:[#allocation8 + $0x60] sm:$0xff] 0.0
          %1355 = vst [vmem:[#allocation8 + $0x68] sm:$0xff] 0.0
          %1356 = vst [vmem:[#allocation8 + $0x70] sm:$0xff] 0.0
          %1357 = vst [vmem:[#allocation8 + $0x78] sm:$0xff] 0.0
        $region76: #{tpu_custom_call.1} parent=43 // pred_fallthru
          _
        // Predicated region
        $region77: #{tpu_custom_call.1} parent=43 // pred_check
          %p1358 = pneg %p1015
        $region78: #{tpu_custom_call.1} parent=43 // pred_check_branch
          %1360 = sbr.rel (%p1358) target = $region80
        $region79: #{tpu_custom_call.1} parent=43 // pred_region
          %v1361 = vld [vmem:[#allocation8] sm:$0xff]
          %v1362 = vld [vmem:[#allocation8 + $0x8] sm:$0xff]
          %v1363 = vld [vmem:[#allocation8 + $0x10] sm:$0xff]
          %v1364 = vld [vmem:[#allocation8 + $0x18] sm:$0xff]
          %v1365 = vld [vmem:[#allocation8 + $0x20] sm:$0xff]
          %v1366 = vld [vmem:[#allocation8 + $0x28] sm:$0xff]
          %v1367 = vld [vmem:[#allocation8 + $0x30] sm:$0xff]
          %v1368 = vld [vmem:[#allocation8 + $0x38] sm:$0xff]
          %v1369 = vld [vmem:[#allocation8 + $0x40] sm:$0xff]
          %v1370 = vld [vmem:[#allocation8 + $0x48] sm:$0xff]
          %v1371 = vld [vmem:[#allocation8 + $0x50] sm:$0xff]
          %v1372 = vld [vmem:[#allocation8 + $0x58] sm:$0xff]
          %v1373 = vld [vmem:[#allocation8 + $0x60] sm:$0xff]
          %v1374 = vld [vmem:[#allocation8 + $0x68] sm:$0xff]
          %v1375 = vld [vmem:[#allocation8 + $0x70] sm:$0xff]
          %v1376 = vld [vmem:[#allocation8 + $0x78] sm:$0xff]
          %v1377 = vld [vmem:[#allocation9] sm:$0xf]
          %v1378 = vld [vmem:[#allocation9 + $0x4] sm:$0xf]
          %v1379 = vld [vmem:[#allocation9 + $0x8] sm:$0xf]
          %v1380 = vld [vmem:[#allocation9 + $0xc] sm:$0xf]
          %v1381 = vld [vmem:[#allocation9 + $0x10] sm:$0xf]
          %v1382 = vld [vmem:[#allocation9 + $0x14] sm:$0xf]
          %v1383 = vld [vmem:[#allocation9 + $0x18] sm:$0xf]
          %v1384 = vld [vmem:[#allocation9 + $0x1c] sm:$0xf]
          %v1385 = vld [vmem:[#allocation9 + $0x20] sm:$0xf]
          %v1386 = vld [vmem:[#allocation9 + $0x24] sm:$0xf]
          %v1387 = vld [vmem:[#allocation9 + $0x28] sm:$0xf]
          %v1388 = vld [vmem:[#allocation9 + $0x2c] sm:$0xf]
          %v1389 = vld [vmem:[#allocation9 + $0x30] sm:$0xf]
          %v1390 = vld [vmem:[#allocation9 + $0x34] sm:$0xf]
          %v1391 = vld [vmem:[#allocation9 + $0x38] sm:$0xf]
          %v1392 = vld [vmem:[#allocation9 + $0x3c] sm:$0xf]
          %s1393 = sshra.s32 %s304, 3
          %s1394 = sand.u32 %s304, 7
          %s1395 = smul.addr %s1393, 4
          %s1396 = scalar_lea.vmem [#allocation6], %s1395
          %v1397 = vld [vmem:[%s1396] sm:$0xf]
          %v1398 = vld [vmem:[%s1396 + $0x4] sm:$0xf]
          %v1399 = vld [vmem:[%s1396 + $0x8] sm:$0xf]
          %v1400 = vld [vmem:[%s1396 + $0xc] sm:$0xf]
          %v1401 = vld [vmem:[%s1396 + $0x10] sm:$0xf]
          %v1402 = vld [vmem:[%s1396 + $0x14] sm:$0xf]
          %v1403 = vld [vmem:[%s1396 + $0x18] sm:$0xf]
          %v1404 = vld [vmem:[%s1396 + $0x1c] sm:$0xf]
          %v1405 = vld [vmem:[%s1396 + $0x20] sm:$0xf]
          %v1406 = vld [vmem:[%s1396 + $0x24] sm:$0xf]
          %v1407 = vld [vmem:[%s1396 + $0x28] sm:$0xf]
          %v1408 = vld [vmem:[%s1396 + $0x2c] sm:$0xf]
          %v1409 = vld [vmem:[%s1396 + $0x30] sm:$0xf]
          %v1410 = vld [vmem:[%s1396 + $0x34] sm:$0xf]
          %v1411 = vld [vmem:[%s1396 + $0x38] sm:$0xf]
          %v1412 = vld [vmem:[%s1396 + $0x3c] sm:$0xf]
          %v1429 = vunpack.c.l.b16 %v1377
          %v1430 = vunpack.c.l.b16 %v1378
          %v1431 = vunpack.c.l.b16 %v1379
          %v1432 = vunpack.c.l.b16 %v1380
          %v1433 = vunpack.c.l.b16 %v1381
          %v1434 = vunpack.c.l.b16 %v1382
          %v1435 = vunpack.c.l.b16 %v1383
          %v1436 = vunpack.c.l.b16 %v1384
          %v1437 = vunpack.c.l.b16 %v1385
          %v1438 = vunpack.c.l.b16 %v1386
          %v1439 = vunpack.c.l.b16 %v1387
          %v1440 = vunpack.c.l.b16 %v1388
          %v1441 = vunpack.c.l.b16 %v1389
          %v1442 = vunpack.c.l.b16 %v1390
          %v1443 = vunpack.c.l.b16 %v1391
          %v1444 = vunpack.c.l.b16 %v1392
          %v1445 = vpack.c.b16 %v1430, %v1429
          %v1446 = vpack.c.b16 %v1432, %v1431
          %v1447 = vpack.c.b16 %v1434, %v1433
          %v1448 = vpack.c.b16 %v1436, %v1435
          %v1449 = vpack.c.b16 %v1438, %v1437
          %v1450 = vpack.c.b16 %v1440, %v1439
          %v1451 = vpack.c.b16 %v1442, %v1441
          %v1452 = vpack.c.b16 %v1444, %v1443
          %v1477 = vunpack.c.l.b16 %v1397
          %v1478 = vunpack.c.l.b16 %v1398
          %v1479 = vunpack.c.l.b16 %v1399
          %v1480 = vunpack.c.l.b16 %v1400
          %v1481 = vunpack.c.l.b16 %v1401
          %v1482 = vunpack.c.l.b16 %v1402
          %v1483 = vunpack.c.l.b16 %v1403
          %v1484 = vunpack.c.l.b16 %v1404
          %v1485 = vunpack.c.l.b16 %v1405
          %v1486 = vunpack.c.l.b16 %v1406
          %v1487 = vunpack.c.l.b16 %v1407
          %v1488 = vunpack.c.l.b16 %v1408
          %v1489 = vunpack.c.l.b16 %v1409
          %v1490 = vunpack.c.l.b16 %v1410
          %v1491 = vunpack.c.l.b16 %v1411
          %v1492 = vunpack.c.l.b16 %v1412
          %v1493 = vpack.c.b16 %v1478, %v1477
          %v1494 = vpack.c.b16 %v1480, %v1479
          %v1495 = vpack.c.b16 %v1482, %v1481
          %v1496 = vpack.c.b16 %v1484, %v1483
          %v1497 = vpack.c.b16 %v1486, %v1485
          %v1498 = vpack.c.b16 %v1488, %v1487
          %v1499 = vpack.c.b16 %v1490, %v1489
          %v1500 = vpack.c.b16 %v1492, %v1491
          %1509 = vmatpush.bf16.msra.mxu0 %v1500
          %1510 = vmatpush.bf16.msra.mxu0 %v1499
          %1511 = vmatpush.bf16.msra.mxu0 %v1498
          %1512 = vmatpush.bf16.msra.mxu0 %v1497
          %1513 = vmatpush.bf16.msra.mxu0 %v1496
          %1514 = vmatpush.bf16.msra.mxu0 %v1495
          %1515 = vmatpush.bf16.msra.mxu0 %v1494
          %1516 = vmatpush.bf16.msra.mxu0 %v1493
          %1517 = vmatmul.bf16.gmra.mxu0 %v1445
          %v1518 = vpop.f32.mrf.mxu0
          %v1519 = vadd.f32 0.0, %v1518
          %v1520 = vpop.f32.mrf.mxu0
          %v1521 = vadd.f32 0.0, %v1520
          %1522 = vmatmul.bf16.gmra.mxu0 %v1446
          %v1523 = vpop.f32.mrf.mxu0
          %v1524 = vadd.f32 0.0, %v1523
          %v1525 = vpop.f32.mrf.mxu0
          %v1526 = vadd.f32 0.0, %v1525
          %1527 = vmatmul.bf16.gmra.mxu0 %v1447
          %v1528 = vpop.f32.mrf.mxu0
          %v1529 = vadd.f32 0.0, %v1528
          %v1530 = vpop.f32.mrf.mxu0
          %v1531 = vadd.f32 0.0, %v1530
          %1532 = vmatmul.bf16.gmra.mxu0 %v1448
          %v1533 = vpop.f32.mrf.mxu0
          %v1534 = vadd.f32 0.0, %v1533
          %v1535 = vpop.f32.mrf.mxu0
          %v1536 = vadd.f32 0.0, %v1535
          %1537 = vmatmul.bf16.gmra.mxu0 %v1449
          %v1538 = vpop.f32.mrf.mxu0
          %v1539 = vadd.f32 0.0, %v1538
          %v1540 = vpop.f32.mrf.mxu0
          %v1541 = vadd.f32 0.0, %v1540
          %1542 = vmatmul.bf16.gmra.mxu0 %v1450
          %v1543 = vpop.f32.mrf.mxu0
          %v1544 = vadd.f32 0.0, %v1543
          %v1545 = vpop.f32.mrf.mxu0
          %v1546 = vadd.f32 0.0, %v1545
          %1547 = vmatmul.bf16.gmra.mxu0 %v1451
          %v1548 = vpop.f32.mrf.mxu0
          %v1549 = vadd.f32 0.0, %v1548
          %v1550 = vpop.f32.mrf.mxu0
          %v1551 = vadd.f32 0.0, %v1550
          %1552 = vmatmul.bf16.gmra.mxu0 %v1452
          %v1553 = vpop.f32.mrf.mxu0
          %v1554 = vadd.f32 0.0, %v1553
          %v1555 = vpop.f32.mrf.mxu0
          %v1556 = vadd.f32 0.0, %v1555
          %1557 = vdwg.mxu0
          %v1558 = vadd.f32 %v1361, %v1519
          %v1559 = vadd.f32 %v1362, %v1521
          %v1560 = vadd.f32 %v1363, %v1524
          %v1561 = vadd.f32 %v1364, %v1526
          %v1562 = vadd.f32 %v1365, %v1529
          %v1563 = vadd.f32 %v1366, %v1531
          %v1564 = vadd.f32 %v1367, %v1534
          %v1565 = vadd.f32 %v1368, %v1536
          %v1566 = vadd.f32 %v1369, %v1539
          %v1567 = vadd.f32 %v1370, %v1541
          %v1568 = vadd.f32 %v1371, %v1544
          %v1569 = vadd.f32 %v1372, %v1546
          %v1570 = vadd.f32 %v1373, %v1549
          %v1571 = vadd.f32 %v1374, %v1551
          %v1572 = vadd.f32 %v1375, %v1554
          %v1573 = vadd.f32 %v1376, %v1556
          %1574 = vst [vmem:[#allocation8] sm:$0xff] %v1558
          %1575 = vst [vmem:[#allocation8 + $0x8] sm:$0xff] %v1559
          %1576 = vst [vmem:[#allocation8 + $0x10] sm:$0xff] %v1560
          %1577 = vst [vmem:[#allocation8 + $0x18] sm:$0xff] %v1561
          %1578 = vst [vmem:[#allocation8 + $0x20] sm:$0xff] %v1562
          %1579 = vst [vmem:[#allocation8 + $0x28] sm:$0xff] %v1563
          %1580 = vst [vmem:[#allocation8 + $0x30] sm:$0xff] %v1564
          %1581 = vst [vmem:[#allocation8 + $0x38] sm:$0xff] %v1565
          %1582 = vst [vmem:[#allocation8 + $0x40] sm:$0xff] %v1566
          %1583 = vst [vmem:[#allocation8 + $0x48] sm:$0xff] %v1567
          %1584 = vst [vmem:[#allocation8 + $0x50] sm:$0xff] %v1568
          %1585 = vst [vmem:[#allocation8 + $0x58] sm:$0xff] %v1569
          %1586 = vst [vmem:[#allocation8 + $0x60] sm:$0xff] %v1570
          %1587 = vst [vmem:[#allocation8 + $0x68] sm:$0xff] %v1571
          %1588 = vst [vmem:[#allocation8 + $0x70] sm:$0xff] %v1572
          %1589 = vst [vmem:[#allocation8 + $0x78] sm:$0xff] %v1573
        $region80: #{tpu_custom_call.1} parent=43 // pred_fallthru
          _
        // Predicated region
        $region81: #{tpu_custom_call.1} parent=43 // pred_check
          _
        $region82: #{tpu_custom_call.1} parent=43 // pred_check_branch
          %1591 = sbr.rel (%p1016) target = $region84
        $region83: #{tpu_custom_call.1} parent=43 // pred_region
          %v1592 = vld [vmem:[#allocation8] sm:$0xff]
          %v1593 = vld [vmem:[#allocation8 + $0x8] sm:$0xff]
          %v1594 = vld [vmem:[#allocation8 + $0x10] sm:$0xff]
          %v1595 = vld [vmem:[#allocation8 + $0x18] sm:$0xff]
          %v1596 = vld [vmem:[#allocation8 + $0x20] sm:$0xff]
          %v1597 = vld [vmem:[#allocation8 + $0x28] sm:$0xff]
          %v1598 = vld [vmem:[#allocation8 + $0x30] sm:$0xff]
          %v1599 = vld [vmem:[#allocation8 + $0x38] sm:$0xff]
          %v1600 = vld [vmem:[#allocation8 + $0x40] sm:$0xff]
          %v1601 = vld [vmem:[#allocation8 + $0x48] sm:$0xff]
          %v1602 = vld [vmem:[#allocation8 + $0x50] sm:$0xff]
          %v1603 = vld [vmem:[#allocation8 + $0x58] sm:$0xff]
          %v1604 = vld [vmem:[#allocation8 + $0x60] sm:$0xff]
          %v1605 = vld [vmem:[#allocation8 + $0x68] sm:$0xff]
          %v1606 = vld [vmem:[#allocation8 + $0x70] sm:$0xff]
          %v1607 = vld [vmem:[#allocation8 + $0x78] sm:$0xff]
          %v1608 = vld [vmem:[#allocation7] sm:$0xf]
          %v1609 = vld [vmem:[#allocation7 + $0x4] sm:$0xf]
          %v1610 = vld [vmem:[#allocation7 + $0x8] sm:$0xf]
          %v1611 = vld [vmem:[#allocation7 + $0xc] sm:$0xf]
          %v1612 = vld [vmem:[#allocation7 + $0x10] sm:$0xf]
          %v1613 = vld [vmem:[#allocation7 + $0x14] sm:$0xf]
          %v1614 = vld [vmem:[#allocation7 + $0x18] sm:$0xf]
          %v1615 = vld [vmem:[#allocation7 + $0x1c] sm:$0xf]
          %v1616 = vld [vmem:[#allocation7 + $0x20] sm:$0xf]
          %v1617 = vld [vmem:[#allocation7 + $0x24] sm:$0xf]
          %v1618 = vld [vmem:[#allocation7 + $0x28] sm:$0xf]
          %v1619 = vld [vmem:[#allocation7 + $0x2c] sm:$0xf]
          %v1620 = vld [vmem:[#allocation7 + $0x30] sm:$0xf]
          %v1621 = vld [vmem:[#allocation7 + $0x34] sm:$0xf]
          %v1622 = vld [vmem:[#allocation7 + $0x38] sm:$0xf]
          %v1623 = vld [vmem:[#allocation7 + $0x3c] sm:$0xf]
          %v1624 = vunpack.c.l.bf16 %v1608
          %v1625 = vunpack.c.l.bf16 %v1609
          %v1626 = vunpack.c.l.bf16 %v1610
          %v1627 = vunpack.c.l.bf16 %v1611
          %v1628 = vunpack.c.l.bf16 %v1612
          %v1629 = vunpack.c.l.bf16 %v1613
          %v1630 = vunpack.c.l.bf16 %v1614
          %v1631 = vunpack.c.l.bf16 %v1615
          %v1632 = vunpack.c.l.bf16 %v1616
          %v1633 = vunpack.c.l.bf16 %v1617
          %v1634 = vunpack.c.l.bf16 %v1618
          %v1635 = vunpack.c.l.bf16 %v1619
          %v1636 = vunpack.c.l.bf16 %v1620
          %v1637 = vunpack.c.l.bf16 %v1621
          %v1638 = vunpack.c.l.bf16 %v1622
          %v1639 = vunpack.c.l.bf16 %v1623
          %v1640 = vadd.f32 %v1592, %v1624
          %v1641 = vadd.f32 %v1593, %v1625
          %v1642 = vadd.f32 %v1594, %v1626
          %v1643 = vadd.f32 %v1595, %v1627
          %v1644 = vadd.f32 %v1596, %v1628
          %v1645 = vadd.f32 %v1597, %v1629
          %v1646 = vadd.f32 %v1598, %v1630
          %v1647 = vadd.f32 %v1599, %v1631
          %v1648 = vadd.f32 %v1600, %v1632
          %v1649 = vadd.f32 %v1601, %v1633
          %v1650 = vadd.f32 %v1602, %v1634
          %v1651 = vadd.f32 %v1603, %v1635
          %v1652 = vadd.f32 %v1604, %v1636
          %v1653 = vadd.f32 %v1605, %v1637
          %v1654 = vadd.f32 %v1606, %v1638
          %v1655 = vadd.f32 %v1607, %v1639
          %v1656 = vld [vmem:[%s5] sm:$0x1]
          %v1658 = vperm.slane %v1656, 0
          %v1660 = vadd.f32 %v1640, %v1658
          %v1661 = vadd.f32 %v1641, %v1658
          %v1662 = vadd.f32 %v1642, %v1658
          %v1663 = vadd.f32 %v1643, %v1658
          %v1664 = vadd.f32 %v1644, %v1658
          %v1665 = vadd.f32 %v1645, %v1658
          %v1666 = vadd.f32 %v1646, %v1658
          %v1667 = vadd.f32 %v1647, %v1658
          %v1668 = vadd.f32 %v1648, %v1658
          %v1669 = vadd.f32 %v1649, %v1658
          %v1670 = vadd.f32 %v1650, %v1658
          %v1671 = vadd.f32 %v1651, %v1658
          %v1672 = vadd.f32 %v1652, %v1658
          %v1673 = vadd.f32 %v1653, %v1658
          %v1674 = vadd.f32 %v1654, %v1658
          %v1675 = vadd.f32 %v1655, %v1658
          %v1676 = vmax.f32 %v1660, 0.0
          %v1677 = vmax.f32 %v1661, 0.0
          %v1678 = vmax.f32 %v1662, 0.0
          %v1679 = vmax.f32 %v1663, 0.0
          %v1680 = vmax.f32 %v1664, 0.0
          %v1681 = vmax.f32 %v1665, 0.0
          %v1682 = vmax.f32 %v1666, 0.0
          %v1683 = vmax.f32 %v1667, 0.0
          %v1684 = vmax.f32 %v1668, 0.0
          %v1685 = vmax.f32 %v1669, 0.0
          %v1686 = vmax.f32 %v1670, 0.0
          %v1687 = vmax.f32 %v1671, 0.0
          %v1688 = vmax.f32 %v1672, 0.0
          %v1689 = vmax.f32 %v1673, 0.0
          %v1690 = vmax.f32 %v1674, 0.0
          %v1691 = vmax.f32 %v1675, 0.0
          %1692 = vst [vmem:[#allocation17] sm:$0xff] %v1676
          %1693 = vst [vmem:[#allocation17 + $0x8] sm:$0xff] %v1677
          %1694 = vst [vmem:[#allocation17 + $0x10] sm:$0xff] %v1678
          %1695 = vst [vmem:[#allocation17 + $0x18] sm:$0xff] %v1679
          %1696 = vst [vmem:[#allocation17 + $0x20] sm:$0xff] %v1680
          %1697 = vst [vmem:[#allocation17 + $0x28] sm:$0xff] %v1681
          %1698 = vst [vmem:[#allocation17 + $0x30] sm:$0xff] %v1682
          %1699 = vst [vmem:[#allocation17 + $0x38] sm:$0xff] %v1683
          %1700 = vst [vmem:[#allocation17 + $0x40] sm:$0xff] %v1684
          %1701 = vst [vmem:[#allocation17 + $0x48] sm:$0xff] %v1685
          %1702 = vst [vmem:[#allocation17 + $0x50] sm:$0xff] %v1686
          %1703 = vst [vmem:[#allocation17 + $0x58] sm:$0xff] %v1687
          %1704 = vst [vmem:[#allocation17 + $0x60] sm:$0xff] %v1688
          %1705 = vst [vmem:[#allocation17 + $0x68] sm:$0xff] %v1689
          %1706 = vst [vmem:[#allocation17 + $0x70] sm:$0xff] %v1690
          %1707 = vst [vmem:[#allocation17 + $0x78] sm:$0xff] %v1691
        $region84: #{tpu_custom_call.1} parent=43 // pred_fallthru
          _
        // Predicated region
        $region85: #{tpu_custom_call.1} parent=43 // pred_check
          %p1708 = pneg %p177
        $region86: #{tpu_custom_call.1} parent=43 // pred_check_branch
          %1710 = sbr.rel (%p1708) target = $region88
        $region87: #{tpu_custom_call.1} parent=43 // pred_region
          %1712 = vsyncadd [#allocation11], 0
          %s1713 = sshll.u32 [#allocation17], 4
          %s1714 = int_to_ptr.vmem [resolvable:$true] %s1713
          %s1715 = sshll.u32 %s6, 4
          %s1716 = int_to_ptr.hbm [resolvable:$true] %s1715
          %1721 = dma.vmem_to_hbm [thread:$0]  %s1714, 2048, %s1716, [#allocation11], 128, 128, 8
        $region88: #{tpu_custom_call.1} parent=43 // pred_fallthru
          _
        // Predicated region
        $region89: #{tpu_custom_call.1} parent=43 // pred_check
          %p1722 = pneg %p177
        $region90: #{tpu_custom_call.1} parent=43 // pred_check_branch
          %1724 = sbr.rel (%p1722) target = $region92
        $region91: #{tpu_custom_call.1} parent=43 // pred_region
          %1726 = dma.done [#allocation11], 2048
        $region92: #{tpu_custom_call.1} parent=43 // pred_fallthru
          _
      $region44: #{tpu_custom_call.1} parent=5 // pred_fallthru
        _
      %p1727 = scmp.le.s32.totalorder 2, %s16
      // Predicated region
      $region93: #{tpu_custom_call.1} parent=5 // pred_check
        %p1728 = pneg %p1727
      $region94: #{tpu_custom_call.1} parent=5 // pred_check_branch
        %1730 = sbr.rel (%p1728) target = $region96
      $region95: #{tpu_custom_call.1} parent=5 // pred_region
        %s1731 = ssub.s32 %s16, 2
      $region96: #{tpu_custom_call.1} parent=5 // pred_fallthru
        _
    $region6: #{tpu_custom_call.1} parent=1 // loop_footer
      %s20 = sadd.s32 1, %s16
    $region7: #{tpu_custom_call.1} parent=1 // loop_footer_branch
      %15 = sbr.rel target = $region3
    $region8: #{tpu_custom_call.1} parent=1 // loop_exit
      _
    %1732 = vsyncpa [#allocation10], 1
    %s1733 = scalar_lea.sflag [#allocation10], 1
    %1734 = vsyncpa %s1733, 1
    %1735 = vsyncpa [#allocation13], 1
    %1736 = vsyncpa [#allocation16], 1
    %1737 = vsyncpa [#allocation11], 1
    %s1738 = scalar_lea.sflag [#allocation11], 1
    %1739 = vsyncpa %s1738, 1

</llo_original>
